<compile_context>
chip_gen: v6e
topology: v6e:2x2x1
jax: 0.10.0
libtpu: 0.0.40
codegen_flags: <defaults>
</compile_context>

<pallas_src>
import functools

import jax
import jax.numpy as jnp
from jax.experimental import pallas as pl
from jax.experimental.pallas import tpu as pltpu

C = 24               # channels / hidden size (fixed by the module)
CNN_SIZE = 3         # conv kernel width  -> nbr_cnn['3'] = 3 stacked (shared-weight) conv layers
N_CONV = {2: 6, 3: 3, 4: 2, 7: 1}[CNN_SIZE]
NUM_RNN = 2          # number of RNN layers
LANE = 128           # TPU lane width


# ----------------------------------------------------------------------------- shared RNN stage
def _rnn_stack(z, wih_ref, rb_ref, n_rnn):
    # seq_len == 1 and h0 == 0  =>  per layer: h = tanh(x @ W_ih^T + (b_ih + b_hh)).
    # TODO(synk): only valid for seq_len==1 / zero initial hidden state (as in Mod.forward);
    #             a longer sequence would need the recurrent weight_hh term.
    for l in range(n_rnn):
        z = jnp.tanh(
            jnp.dot(z, wih_ref[l * C:(l + 1) * C, :], preferred_element_type=jnp.float32)
            + rb_ref[l:l + 1, :])
    return z


# ----------------------------------------------------------------------------- optimized kernel
def fused_kernel_opt(x_ref, w_ref, cb_ref, wih_ref, rb_ref, o_ref, *,
                     k, n_conv, n_rnn, l_out):
    # x_ref:   (C, LP)   f32, lane-aligned slab (LP % 128 == 0); cols >= L are padding
    # w_ref:   (k*C, C)  f32, rows [kk*C:(kk+1)*C] = conv W[:, :, kk]
    # cb_ref:  (C, 1)    f32, conv bias column
    # wih_ref: (R*C, C)  f32, rows [l*C:(l+1)*C] = W_ih_l^T
    # rb_ref:  (R, C)    f32, pre-summed b_ih + b_hh per RNN layer
    # o_ref:   (L_out, C)
    h = x_ref[...]
    b = cb_ref[...]
    lp = h.shape[1]
    for _ in range(n_conv):
        acc = b
        for kk in range(k):
            # tap[:, t] == h[:, t+kk] on every column we ever consume downstream;
            # wrapped/padded garbage only lands in columns that are never read.
            tap = h if kk == 0 else pltpu.roll(h, shift=lp - kk, axis=-1)
            acc = acc + jnp.dot(w_ref[kk * C:(kk + 1) * C, :], tap,
                                preferred_element_type=jnp.float32)
        h = jax.nn.sigmoid(acc)
    # torch .view(1, -1, 24): raw row-major (C, l_out) -> (l_out, C), done in registers.
    z = h[:, :l_out].reshape(l_out, C)
    o_ref[...] = _rnn_stack(z, wih_ref, rb_ref, n_rnn).astype(o_ref.dtype)


# ----------------------------------------------------------------------------- conservative kernel
def fused_kernel_safe(x_ref, w_ref, cb_ref, wih_ref, rb_ref, o_ref, a_ref, z_ref, *,
                      k, n_conv, n_rnn, l_out, l_in):
    """Previously-proven lowering: sliced taps + explicit per-row relayout via VMEM scratch."""
    h = x_ref[...][:, :l_in]
    b = cb_ref[...]
    for _ in range(n_conv):
        out_len = h.shape[1] - (k - 1)
        acc = b
        for kk in range(k):
            acc = acc + jnp.dot(w_ref[kk * C:(kk + 1) * C, :], h[:, kk:kk + out_len],
                                preferred_element_type=jnp.float32)
        h = jax.nn.sigmoid(acc)
    a_ref[...] = h                                   # (C, l_out)
    for i in range(l_out):                           # row-major relayout, row by row
        r0, c0 = divmod(i * C, l_out)
        if c0 + C <= l_out:
            z_ref[i:i + 1, :] = a_ref[r0:r0 + 1, c0:c0 + C]
        else:                                        # row straddles two source rows
            split = l_out - c0
            z_ref[i:i + 1, :split] = a_ref[r0:r0 + 1, c0:]
            z_ref[i:i + 1, split:] = a_ref[r0 + 1:r0 + 2, :C - split]
    o_ref[...] = _rnn_stack(z_ref[...], wih_ref, rb_ref, n_rnn).astype(o_ref.dtype)


# ----------------------------------------------------------------------------- wrappers
def prepare_params(conv_w, conv_b, rnn_wih, rnn_bih, rnn_bhh):
    """One-time parameter re-layout (hoisted out of the forward path)."""
    k = conv_w.shape[-1]
    w_slab = jnp.transpose(conv_w, (2, 0, 1)).reshape(k * C, C)    # rows kk*C.. = W[:,:,kk]
    cb_col = conv_b.reshape(C, 1)                                  # (C, 1)
    wih_slab = jnp.transpose(rnn_wih, (0, 2, 1)).reshape(-1, C)    # rows l*C.. = W_ih_l^T
    rb = rnn_bih + rnn_bhh                                         # (R, C) pre-summed bias
    return w_slab, cb_col, wih_slab, rb


@functools.partial(jax.jit, static_argnames=("in_registers",))
def mod_forward(x, w_slab, cb_col, wih_slab, rb, *, in_registers=True):
    """Pallas implementation of Mod.forward.  x: any f32 array with numel % 24 == 0."""
    assert x.size % C == 0, "torch x.view(1, 24, -1) requires numel divisible by 24"
    xx = x.reshape(C, -1)                            # torch: x.view(1, 24, -1), batch squeezed
    L = xx.shape[1]
    L_out = L - N_CONV * (CNN_SIZE - 1)
    assert L_out >= 1
    LP = pl.cdiv(L, LANE) * LANE                     # fixed lane-aligned conv slab width
    xx = jnp.pad(xx, ((0, 0), (0, LP - L)))

    if in_registers:
        kernel = functools.partial(fused_kernel_opt, k=CNN_SIZE, n_conv=N_CONV,
                                   n_rnn=NUM_RNN, l_out=L_out)
        scratch = []
    else:
        assert L_out >= C, "fallback relayout assumes each flat 24-elem row spans <= 2 source rows"
        kernel = functools.partial(fused_kernel_safe, k=CNN_SIZE, n_conv=N_CONV,
                                   n_rnn=NUM_RNN, l_out=L_out, l_in=L)
        scratch = [pltpu.VMEM((C, L_out), jnp.float32),
                   pltpu.VMEM((L_out, C), jnp.float32)]

    z = pl.pallas_call(
        kernel,
        out_shape=jax.ShapeDtypeStruct((L_out, C), jnp.float32),
        in_specs=[pl.BlockSpec(memory_space=pltpu.MemorySpace.VMEM)] * 5,
        out_specs=pl.BlockSpec(memory_space=pltpu.MemorySpace.VMEM),
        scratch_shapes=scratch,
    )(xx, w_slab, cb_col, wih_slab, rb)

    return z.reshape(1, L_out, C)                    # (1, L', 24), matches torch output shape


# ----------------------------------------------------------------------------- pure-JAX reference
def ref_forward(x, conv_w, conv_b, rnn_wih, rnn_bih, rnn_bhh):
    y = x.reshape(C, -1)
    for _ in range(N_CONV):
        out_len = y.shape[1] - (CNN_SIZE - 1)
        acc = conv_b[:, None]
        for kk in range(CNN_SIZE):
            acc = acc + conv_w[:, :, kk] @ y[:, kk:kk + out_len]
        y = jax.nn.sigmoid(acc)
    h = y.reshape(-1, C)
    for l in range(NUM_RNN):
        h = jnp.tanh(h @ rnn_wih[l].T + rnn_bih[l] + rnn_bhh[l])
    return h.reshape(1, -1, C)


if __name__ == "__main__":
    key = jax.random.PRNGKey(0)
    k_x, k_cw, k_cb, k_wih, k_bih, k_bhh = jax.random.split(key, 6)

    # input: (1, 24, 72)  (any shape with numel % 24 == 0; forward views it to (1, 24, -1))
    L = 72
    x = jax.random.normal(k_x, (1, C, L), dtype=jnp.float32)

    # deterministic parameter init (torch-style uniform bounds; shapes from __init__)
    cb_bound = 1.0 / (C * CNN_SIZE) ** 0.5
    conv_w = jax.random.uniform(k_cw, (C, C, CNN_SIZE), jnp.float32, -cb_bound, cb_bound)
    conv_b = jax.random.uniform(k_cb, (C,), jnp.float32, -cb_bound, cb_bound)

    r_bound = 1.0 / C ** 0.5
    rnn_wih = jax.random.uniform(k_wih, (NUM_RNN, C, C), jnp.float32, -r_bound, r_bound)
    rnn_bih = jax.random.uniform(k_bih, (NUM_RNN, C), jnp.float32, -r_bound, r_bound)
    rnn_bhh = jax.random.uniform(k_bhh, (NUM_RNN, C), jnp.float32, -r_bound, r_bound)
    # weight_hh_l* of nn.RNN is mathematically irrelevant here (seq_len=1, h0=0);
    # only bias_hh contributes, so it is the only hh parameter materialized.

    params = prepare_params(conv_w, conv_b, rnn_wih, rnn_bih, rnn_bhh)   # one-time, off hot path
    params = jax.tree_util.tree_map(jax.block_until_ready, params)

    ref = jax.block_until_ready(ref_forward(x, conv_w, conv_b, rnn_wih, rnn_bih, rnn_bhh))
    L_out = L - N_CONV * (CNN_SIZE - 1)

    def _run(in_registers):
        out = mod_forward(x, *params, in_registers=in_registers)
        out = jax.block_until_ready(out)
        assert out.shape == (1, L_out, C), out.shape
        assert jnp.allclose(out, ref, rtol=1e-4, atol=1e-4), float(jnp.max(jnp.abs(out - ref)))
        return out

    try:
        out = _run(True)        # optimized path: roll-built taps + in-register .view reshape
    except Exception:           # older Mosaic without general in-kernel reshape/roll support
        out = _run(False)       # proven conservative lowering (scratch-based relayout)

    print("KERNEL_OK")
</pallas_src>

<mosaic_0001>
module attributes {stable_mosaic.version = 11 : i64} {
  func.func @fused_kernel_safe(%arg0: memref<24x128xf32, #tpu.memory_space<vmem>>, %arg1: memref<72x24xf32, #tpu.memory_space<vmem>>, %arg2: memref<24x1xf32, #tpu.memory_space<vmem>>, %arg3: memref<48x24xf32, #tpu.memory_space<vmem>>, %arg4: memref<2x24xf32, #tpu.memory_space<vmem>>, %arg5: memref<66x24xf32, #tpu.memory_space<vmem>>, %arg6: memref<24x66xf32, #tpu.memory_space<vmem>>, %arg7: memref<66x24xf32, #tpu.memory_space<vmem>>) attributes {dimension_semantics = [], scalar_prefetch = 0 : i64, scratch_operands = 2 : i64, tpu.core_type = #tpu.core_type<tc>} {
    %c0 = arith.constant 0 : index
    %c0_0 = arith.constant 0 : index
    %0 = vector.load %arg0[%c0, %c0_0] : memref<24x128xf32, #tpu.memory_space<vmem>>, vector<24x128xf32>
    %1 = vector.extract_strided_slice %0 {offsets = [0, 0], sizes = [24, 72], strides = [1, 1]} : vector<24x128xf32> to vector<24x72xf32>
    %c0_1 = arith.constant 0 : index
    %c0_2 = arith.constant 0 : index
    %2 = vector.load %arg2[%c0_1, %c0_2] : memref<24x1xf32, #tpu.memory_space<vmem>>, vector<24x1xf32>
    %c0_3 = arith.constant 0 : index
    %c0_4 = arith.constant 0 : index
    %3 = vector.load %arg1[%c0_3, %c0_4] : memref<72x24xf32, #tpu.memory_space<vmem>>, vector<24x24xf32>
    %4 = vector.extract_strided_slice %1 {offsets = [0, 0], sizes = [24, 70], strides = [1, 1]} : vector<24x72xf32> to vector<24x70xf32>
    %cst = arith.constant dense<0.000000e+00> : vector<24x70xf32>
    %5 = tpu.matmul %3, %4, %cst {dimension_numbers = #tpu.dot_dimension_numbers<[1], [0], [0], [1], [0, 0, 1, 1], [], []>} : vector<24x24xf32>, vector<24x70xf32>, vector<24x70xf32> -> vector<24x70xf32>
    %6 = vector.broadcast %2 : vector<24x1xf32> to vector<24x70xf32>
    %7 = arith.addf %6, %5 : vector<24x70xf32>
    %c24 = arith.constant 24 : index
    %c0_5 = arith.constant 0 : index
    %8 = vector.load %arg1[%c24, %c0_5] : memref<72x24xf32, #tpu.memory_space<vmem>>, vector<24x24xf32>
    %9 = vector.extract_strided_slice %1 {offsets = [0, 1], sizes = [24, 70], strides = [1, 1]} : vector<24x72xf32> to vector<24x70xf32>
    %cst_6 = arith.constant dense<0.000000e+00> : vector<24x70xf32>
    %10 = tpu.matmul %8, %9, %cst_6 {dimension_numbers = #tpu.dot_dimension_numbers<[1], [0], [0], [1], [0, 0, 1, 1], [], []>} : vector<24x24xf32>, vector<24x70xf32>, vector<24x70xf32> -> vector<24x70xf32>
    %11 = arith.addf %7, %10 : vector<24x70xf32>
    %c48 = arith.constant 48 : index
    %c0_7 = arith.constant 0 : index
    %12 = vector.load %arg1[%c48, %c0_7] : memref<72x24xf32, #tpu.memory_space<vmem>>, vector<24x24xf32>
    %13 = vector.extract_strided_slice %1 {offsets = [0, 2], sizes = [24, 70], strides = [1, 1]} : vector<24x72xf32> to vector<24x70xf32>
    %cst_8 = arith.constant dense<0.000000e+00> : vector<24x70xf32>
    %14 = tpu.matmul %12, %13, %cst_8 {dimension_numbers = #tpu.dot_dimension_numbers<[1], [0], [0], [1], [0, 0, 1, 1], [], []>} : vector<24x24xf32>, vector<24x70xf32>, vector<24x70xf32> -> vector<24x70xf32>
    %15 = arith.addf %11, %14 : vector<24x70xf32>
    %16 = arith.negf %15 : vector<24x70xf32>
    %17 = math.exp %16 : vector<24x70xf32>
    %cst_9 = arith.constant 1.000000e+00 : f32
    %18 = vector.broadcast %cst_9 : f32 to vector<24x70xf32>
    %19 = arith.addf %18, %17 : vector<24x70xf32>
    %20 = arith.divf %18, %19 : vector<24x70xf32>
    %c0_10 = arith.constant 0 : index
    %c0_11 = arith.constant 0 : index
    %21 = vector.load %arg1[%c0_10, %c0_11] : memref<72x24xf32, #tpu.memory_space<vmem>>, vector<24x24xf32>
    %22 = vector.extract_strided_slice %20 {offsets = [0, 0], sizes = [24, 68], strides = [1, 1]} : vector<24x70xf32> to vector<24x68xf32>
    %cst_12 = arith.constant dense<0.000000e+00> : vector<24x68xf32>
    %23 = tpu.matmul %21, %22, %cst_12 {dimension_numbers = #tpu.dot_dimension_numbers<[1], [0], [0], [1], [0, 0, 1, 1], [], []>} : vector<24x24xf32>, vector<24x68xf32>, vector<24x68xf32> -> vector<24x68xf32>
    %24 = vector.broadcast %2 : vector<24x1xf32> to vector<24x68xf32>
    %25 = arith.addf %24, %23 : vector<24x68xf32>
    %c24_13 = arith.constant 24 : index
    %c0_14 = arith.constant 0 : index
    %26 = vector.load %arg1[%c24_13, %c0_14] : memref<72x24xf32, #tpu.memory_space<vmem>>, vector<24x24xf32>
    %27 = vector.extract_strided_slice %20 {offsets = [0, 1], sizes = [24, 68], strides = [1, 1]} : vector<24x70xf32> to vector<24x68xf32>
    %cst_15 = arith.constant dense<0.000000e+00> : vector<24x68xf32>
    %28 = tpu.matmul %26, %27, %cst_15 {dimension_numbers = #tpu.dot_dimension_numbers<[1], [0], [0], [1], [0, 0, 1, 1], [], []>} : vector<24x24xf32>, vector<24x68xf32>, vector<24x68xf32> -> vector<24x68xf32>
    %29 = arith.addf %25, %28 : vector<24x68xf32>
    %c48_16 = arith.constant 48 : index
    %c0_17 = arith.constant 0 : index
    %30 = vector.load %arg1[%c48_16, %c0_17] : memref<72x24xf32, #tpu.memory_space<vmem>>, vector<24x24xf32>
    %31 = vector.extract_strided_slice %20 {offsets = [0, 2], sizes = [24, 68], strides = [1, 1]} : vector<24x70xf32> to vector<24x68xf32>
    %cst_18 = arith.constant dense<0.000000e+00> : vector<24x68xf32>
    %32 = tpu.matmul %30, %31, %cst_18 {dimension_numbers = #tpu.dot_dimension_numbers<[1], [0], [0], [1], [0, 0, 1, 1], [], []>} : vector<24x24xf32>, vector<24x68xf32>, vector<24x68xf32> -> vector<24x68xf32>
    %33 = arith.addf %29, %32 : vector<24x68xf32>
    %34 = arith.negf %33 : vector<24x68xf32>
    %35 = math.exp %34 : vector<24x68xf32>
    %cst_19 = arith.constant 1.000000e+00 : f32
    %36 = vector.broadcast %cst_19 : f32 to vector<24x68xf32>
    %37 = arith.addf %36, %35 : vector<24x68xf32>
    %38 = arith.divf %36, %37 : vector<24x68xf32>
    %c0_20 = arith.constant 0 : index
    %c0_21 = arith.constant 0 : index
    %39 = vector.load %arg1[%c0_20, %c0_21] : memref<72x24xf32, #tpu.memory_space<vmem>>, vector<24x24xf32>
    %40 = vector.extract_strided_slice %38 {offsets = [0, 0], sizes = [24, 66], strides = [1, 1]} : vector<24x68xf32> to vector<24x66xf32>
    %cst_22 = arith.constant dense<0.000000e+00> : vector<24x66xf32>
    %41 = tpu.matmul %39, %40, %cst_22 {dimension_numbers = #tpu.dot_dimension_numbers<[1], [0], [0], [1], [0, 0, 1, 1], [], []>} : vector<24x24xf32>, vector<24x66xf32>, vector<24x66xf32> -> vector<24x66xf32>
    %42 = vector.broadcast %2 : vector<24x1xf32> to vector<24x66xf32>
    %43 = arith.addf %42, %41 : vector<24x66xf32>
    %c24_23 = arith.constant 24 : index
    %c0_24 = arith.constant 0 : index
    %44 = vector.load %arg1[%c24_23, %c0_24] : memref<72x24xf32, #tpu.memory_space<vmem>>, vector<24x24xf32>
    %45 = vector.extract_strided_slice %38 {offsets = [0, 1], sizes = [24, 66], strides = [1, 1]} : vector<24x68xf32> to vector<24x66xf32>
    %cst_25 = arith.constant dense<0.000000e+00> : vector<24x66xf32>
    %46 = tpu.matmul %44, %45, %cst_25 {dimension_numbers = #tpu.dot_dimension_numbers<[1], [0], [0], [1], [0, 0, 1, 1], [], []>} : vector<24x24xf32>, vector<24x66xf32>, vector<24x66xf32> -> vector<24x66xf32>
    %47 = arith.addf %43, %46 : vector<24x66xf32>
    %c48_26 = arith.constant 48 : index
    %c0_27 = arith.constant 0 : index
    %48 = vector.load %arg1[%c48_26, %c0_27] : memref<72x24xf32, #tpu.memory_space<vmem>>, vector<24x24xf32>
    %49 = vector.extract_strided_slice %38 {offsets = [0, 2], sizes = [24, 66], strides = [1, 1]} : vector<24x68xf32> to vector<24x66xf32>
    %cst_28 = arith.constant dense<0.000000e+00> : vector<24x66xf32>
    %50 = tpu.matmul %48, %49, %cst_28 {dimension_numbers = #tpu.dot_dimension_numbers<[1], [0], [0], [1], [0, 0, 1, 1], [], []>} : vector<24x24xf32>, vector<24x66xf32>, vector<24x66xf32> -> vector<24x66xf32>
    %51 = arith.addf %47, %50 : vector<24x66xf32>
    %52 = arith.negf %51 : vector<24x66xf32>
    %53 = math.exp %52 : vector<24x66xf32>
    %cst_29 = arith.constant 1.000000e+00 : f32
    %54 = vector.broadcast %cst_29 : f32 to vector<24x66xf32>
    %55 = arith.addf %54, %53 : vector<24x66xf32>
    %56 = arith.divf %54, %55 : vector<24x66xf32>
    %c0_30 = arith.constant 0 : index
    %c0_31 = arith.constant 0 : index
    %57 = vector.load %arg6[%c0_30, %c0_31] : memref<24x66xf32, #tpu.memory_space<vmem>>, vector<24x66xf32>
    tpu.vector_store %arg6[%c0_30, %c0_31], %56 {strides = array<i32>} : memref<24x66xf32, #tpu.memory_space<vmem>>, vector<24x66xf32>,
    %c0_32 = arith.constant 0 : index
    %c0_33 = arith.constant 0 : index
    %58 = vector.load %arg6[%c0_32, %c0_33] : memref<24x66xf32, #tpu.memory_space<vmem>>, vector<1x24xf32>
    %c0_34 = arith.constant 0 : index
    %c0_35 = arith.constant 0 : index
    %59 = vector.load %arg7[%c0_34, %c0_35] : memref<66x24xf32, #tpu.memory_space<vmem>>, vector<1x24xf32>
    tpu.vector_store %arg7[%c0_34, %c0_35], %58 {strides = array<i32>} : memref<66x24xf32, #tpu.memory_space<vmem>>, vector<1x24xf32>,
    %c0_36 = arith.constant 0 : index
    %c24_37 = arith.constant 24 : index
    %60 = vector.load %arg6[%c0_36, %c24_37] : memref<24x66xf32, #tpu.memory_space<vmem>>, vector<1x24xf32>
    %c1 = arith.constant 1 : index
    %c0_38 = arith.constant 0 : index
    %61 = vector.load %arg7[%c1, %c0_38] : memref<66x24xf32, #tpu.memory_space<vmem>>, vector<1x24xf32>
    tpu.vector_store %arg7[%c1, %c0_38], %60 {strides = array<i32>} : memref<66x24xf32, #tpu.memory_space<vmem>>, vector<1x24xf32>,
    %c0_39 = arith.constant 0 : index
    %c48_40 = arith.constant 48 : index
    %62 = vector.load %arg6[%c0_39, %c48_40] : memref<24x66xf32, #tpu.memory_space<vmem>>, vector<1x18xf32>
    %c2 = arith.constant 2 : index
    %c0_41 = arith.constant 0 : index
    %63 = vector.load %arg7[%c2, %c0_41] : memref<66x24xf32, #tpu.memory_space<vmem>>, vector<1x18xf32>
    tpu.vector_store %arg7[%c2, %c0_41], %62 {strides = array<i32>} : memref<66x24xf32, #tpu.memory_space<vmem>>, vector<1x18xf32>,
    %c1_42 = arith.constant 1 : index
    %c0_43 = arith.constant 0 : index
    %64 = vector.load %arg6[%c1_42, %c0_43] : memref<24x66xf32, #tpu.memory_space<vmem>>, vector<1x6xf32>
    %c2_44 = arith.constant 2 : index
    %c18 = arith.constant 18 : index
    %65 = vector.load %arg7[%c2_44, %c18] : memref<66x24xf32, #tpu.memory_space<vmem>>, vector<1x6xf32>
    tpu.vector_store %arg7[%c2_44, %c18], %64 {strides = array<i32>} : memref<66x24xf32, #tpu.memory_space<vmem>>, vector<1x6xf32>,
    %c1_45 = arith.constant 1 : index
    %c6 = arith.constant 6 : index
    %66 = vector.load %arg6[%c1_45, %c6] : memref<24x66xf32, #tpu.memory_space<vmem>>, vector<1x24xf32>
    %c3 = arith.constant 3 : index
    %c0_46 = arith.constant 0 : index
    %67 = vector.load %arg7[%c3, %c0_46] : memref<66x24xf32, #tpu.memory_space<vmem>>, vector<1x24xf32>
    tpu.vector_store %arg7[%c3, %c0_46], %66 {strides = array<i32>} : memref<66x24xf32, #tpu.memory_space<vmem>>, vector<1x24xf32>,
    %c1_47 = arith.constant 1 : index
    %c30 = arith.constant 30 : index
    %68 = vector.load %arg6[%c1_47, %c30] : memref<24x66xf32, #tpu.memory_space<vmem>>, vector<1x24xf32>
    %c4 = arith.constant 4 : index
    %c0_48 = arith.constant 0 : index
    %69 = vector.load %arg7[%c4, %c0_48] : memref<66x24xf32, #tpu.memory_space<vmem>>, vector<1x24xf32>
    tpu.vector_store %arg7[%c4, %c0_48], %68 {strides = array<i32>} : memref<66x24xf32, #tpu.memory_space<vmem>>, vector<1x24xf32>,
    %c1_49 = arith.constant 1 : index
    %c54 = arith.constant 54 : index
    %70 = vector.load %arg6[%c1_49, %c54] : memref<24x66xf32, #tpu.memory_space<vmem>>, vector<1x12xf32>
    %c5 = arith.constant 5 : index
    %c0_50 = arith.constant 0 : index
    %71 = vector.load %arg7[%c5, %c0_50] : memref<66x24xf32, #tpu.memory_space<vmem>>, vector<1x12xf32>
    tpu.vector_store %arg7[%c5, %c0_50], %70 {strides = array<i32>} : memref<66x24xf32, #tpu.memory_space<vmem>>, vector<1x12xf32>,
    %c2_51 = arith.constant 2 : index
    %c0_52 = arith.constant 0 : index
    %72 = vector.load %arg6[%c2_51, %c0_52] : memref<24x66xf32, #tpu.memory_space<vmem>>, vector<1x12xf32>
    %c5_53 = arith.constant 5 : index
    %c12 = arith.constant 12 : index
    %73 = vector.load %arg7[%c5_53, %c12] : memref<66x24xf32, #tpu.memory_space<vmem>>, vector<1x12xf32>
    tpu.vector_store %arg7[%c5_53, %c12], %72 {strides = array<i32>} : memref<66x24xf32, #tpu.memory_space<vmem>>, vector<1x12xf32>,
    %c2_54 = arith.constant 2 : index
    %c12_55 = arith.constant 12 : index
    %74 = vector.load %arg6[%c2_54, %c12_55] : memref<24x66xf32, #tpu.memory_space<vmem>>, vector<1x24xf32>
    %c6_56 = arith.constant 6 : index
    %c0_57 = arith.constant 0 : index
    %75 = vector.load %arg7[%c6_56, %c0_57] : memref<66x24xf32, #tpu.memory_space<vmem>>, vector<1x24xf32>
    tpu.vector_store %arg7[%c6_56, %c0_57], %74 {strides = array<i32>} : memref<66x24xf32, #tpu.memory_space<vmem>>, vector<1x24xf32>,
    %c2_58 = arith.constant 2 : index
    %c36 = arith.constant 36 : index
    %76 = vector.load %arg6[%c2_58, %c36] : memref<24x66xf32, #tpu.memory_space<vmem>>, vector<1x24xf32>
    %c7 = arith.constant 7 : index
    %c0_59 = arith.constant 0 : index
    %77 = vector.load %arg7[%c7, %c0_59] : memref<66x24xf32, #tpu.memory_space<vmem>>, vector<1x24xf32>
    tpu.vector_store %arg7[%c7, %c0_59], %76 {strides = array<i32>} : memref<66x24xf32, #tpu.memory_space<vmem>>, vector<1x24xf32>,
    %c2_60 = arith.constant 2 : index
    %c60 = arith.constant 60 : index
    %78 = vector.load %arg6[%c2_60, %c60] : memref<24x66xf32, #tpu.memory_space<vmem>>, vector<1x6xf32>
    %c8 = arith.constant 8 : index
    %c0_61 = arith.constant 0 : index
    %79 = vector.load %arg7[%c8, %c0_61] : memref<66x24xf32, #tpu.memory_space<vmem>>, vector<1x6xf32>
    tpu.vector_store %arg7[%c8, %c0_61], %78 {strides = array<i32>} : memref<66x24xf32, #tpu.memory_space<vmem>>, vector<1x6xf32>,
    %c3_62 = arith.constant 3 : index
    %c0_63 = arith.constant 0 : index
    %80 = vector.load %arg6[%c3_62, %c0_63] : memref<24x66xf32, #tpu.memory_space<vmem>>, vector<1x18xf32>
    %c8_64 = arith.constant 8 : index
    %c6_65 = arith.constant 6 : index
    %81 = vector.load %arg7[%c8_64, %c6_65] : memref<66x24xf32, #tpu.memory_space<vmem>>, vector<1x18xf32>
    tpu.vector_store %arg7[%c8_64, %c6_65], %80 {strides = array<i32>} : memref<66x24xf32, #tpu.memory_space<vmem>>, vector<1x18xf32>,
    %c3_66 = arith.constant 3 : index
    %c18_67 = arith.constant 18 : index
    %82 = vector.load %arg6[%c3_66, %c18_67] : memref<24x66xf32, #tpu.memory_space<vmem>>, vector<1x24xf32>
    %c9 = arith.constant 9 : index
    %c0_68 = arith.constant 0 : index
    %83 = vector.load %arg7[%c9, %c0_68] : memref<66x24xf32, #tpu.memory_space<vmem>>, vector<1x24xf32>
    tpu.vector_store %arg7[%c9, %c0_68], %82 {strides = array<i32>} : memref<66x24xf32, #tpu.memory_space<vmem>>, vector<1x24xf32>,
    %c3_69 = arith.constant 3 : index
    %c42 = arith.constant 42 : index
    %84 = vector.load %arg6[%c3_69, %c42] : memref<24x66xf32, #tpu.memory_space<vmem>>, vector<1x24xf32>
    %c10 = arith.constant 10 : index
    %c0_70 = arith.constant 0 : index
    %85 = vector.load %arg7[%c10, %c0_70] : memref<66x24xf32, #tpu.memory_space<vmem>>, vector<1x24xf32>
    tpu.vector_store %arg7[%c10, %c0_70], %84 {strides = array<i32>} : memref<66x24xf32, #tpu.memory_space<vmem>>, vector<1x24xf32>,
    %c4_71 = arith.constant 4 : index
    %c0_72 = arith.constant 0 : index
    %86 = vector.load %arg6[%c4_71, %c0_72] : memref<24x66xf32, #tpu.memory_space<vmem>>, vector<1x24xf32>
    %c11 = arith.constant 11 : index
    %c0_73 = arith.constant 0 : index
    %87 = vector.load %arg7[%c11, %c0_73] : memref<66x24xf32, #tpu.memory_space<vmem>>, vector<1x24xf32>
    tpu.vector_store %arg7[%c11, %c0_73], %86 {strides = array<i32>} : memref<66x24xf32, #tpu.memory_space<vmem>>, vector<1x24xf32>,
    %c4_74 = arith.constant 4 : index
    %c24_75 = arith.constant 24 : index
    %88 = vector.load %arg6[%c4_74, %c24_75] : memref<24x66xf32, #tpu.memory_space<vmem>>, vector<1x24xf32>
    %c12_76 = arith.constant 12 : index
    %c0_77 = arith.constant 0 : index
    %89 = vector.load %arg7[%c12_76, %c0_77] : memref<66x24xf32, #tpu.memory_space<vmem>>, vector<1x24xf32>
    tpu.vector_store %arg7[%c12_76, %c0_77], %88 {strides = array<i32>} : memref<66x24xf32, #tpu.memory_space<vmem>>, vector<1x24xf32>,
    %c4_78 = arith.constant 4 : index
    %c48_79 = arith.constant 48 : index
    %90 = vector.load %arg6[%c4_78, %c48_79] : memref<24x66xf32, #tpu.memory_space<vmem>>, vector<1x18xf32>
    %c13 = arith.constant 13 : index
    %c0_80 = arith.constant 0 : index
    %91 = vector.load %arg7[%c13, %c0_80] : memref<66x24xf32, #tpu.memory_space<vmem>>, vector<1x18xf32>
    tpu.vector_store %arg7[%c13, %c0_80], %90 {strides = array<i32>} : memref<66x24xf32, #tpu.memory_space<vmem>>, vector<1x18xf32>,
    %c5_81 = arith.constant 5 : index
    %c0_82 = arith.constant 0 : index
    %92 = vector.load %arg6[%c5_81, %c0_82] : memref<24x66xf32, #tpu.memory_space<vmem>>, vector<1x6xf32>
    %c13_83 = arith.constant 13 : index
    %c18_84 = arith.constant 18 : index
    %93 = vector.load %arg7[%c13_83, %c18_84] : memref<66x24xf32, #tpu.memory_space<vmem>>, vector<1x6xf32>
    tpu.vector_store %arg7[%c13_83, %c18_84], %92 {strides = array<i32>} : memref<66x24xf32, #tpu.memory_space<vmem>>, vector<1x6xf32>,
    %c5_85 = arith.constant 5 : index
    %c6_86 = arith.constant 6 : index
    %94 = vector.load %arg6[%c5_85, %c6_86] : memref<24x66xf32, #tpu.memory_space<vmem>>, vector<1x24xf32>
    %c14 = arith.constant 14 : index
    %c0_87 = arith.constant 0 : index
    %95 = vector.load %arg7[%c14, %c0_87] : memref<66x24xf32, #tpu.memory_space<vmem>>, vector<1x24xf32>
    tpu.vector_store %arg7[%c14, %c0_87], %94 {strides = array<i32>} : memref<66x24xf32, #tpu.memory_space<vmem>>, vector<1x24xf32>,
    %c5_88 = arith.constant 5 : index
    %c30_89 = arith.constant 30 : index
    %96 = vector.load %arg6[%c5_88, %c30_89] : memref<24x66xf32, #tpu.memory_space<vmem>>, vector<1x24xf32>
    %c15 = arith.constant 15 : index
    %c0_90 = arith.constant 0 : index
    %97 = vector.load %arg7[%c15, %c0_90] : memref<66x24xf32, #tpu.memory_space<vmem>>, vector<1x24xf32>
    tpu.vector_store %arg7[%c15, %c0_90], %96 {strides = array<i32>} : memref<66x24xf32, #tpu.memory_space<vmem>>, vector<1x24xf32>,
    %c5_91 = arith.constant 5 : index
    %c54_92 = arith.constant 54 : index
    %98 = vector.load %arg6[%c5_91, %c54_92] : memref<24x66xf32, #tpu.memory_space<vmem>>, vector<1x12xf32>
    %c16 = arith.constant 16 : index
    %c0_93 = arith.constant 0 : index
    %99 = vector.load %arg7[%c16, %c0_93] : memref<66x24xf32, #tpu.memory_space<vmem>>, vector<1x12xf32>
    tpu.vector_store %arg7[%c16, %c0_93], %98 {strides = array<i32>} : memref<66x24xf32, #tpu.memory_space<vmem>>, vector<1x12xf32>,
    %c6_94 = arith.constant 6 : index
    %c0_95 = arith.constant 0 : index
    %100 = vector.load %arg6[%c6_94, %c0_95] : memref<24x66xf32, #tpu.memory_space<vmem>>, vector<1x12xf32>
    %c16_96 = arith.constant 16 : index
    %c12_97 = arith.constant 12 : index
    %101 = vector.load %arg7[%c16_96, %c12_97] : memref<66x24xf32, #tpu.memory_space<vmem>>, vector<1x12xf32>
    tpu.vector_store %arg7[%c16_96, %c12_97], %100 {strides = array<i32>} : memref<66x24xf32, #tpu.memory_space<vmem>>, vector<1x12xf32>,
    %c6_98 = arith.constant 6 : index
    %c12_99 = arith.constant 12 : index
    %102 = vector.load %arg6[%c6_98, %c12_99] : memref<24x66xf32, #tpu.memory_space<vmem>>, vector<1x24xf32>
    %c17 = arith.constant 17 : index
    %c0_100 = arith.constant 0 : index
    %103 = vector.load %arg7[%c17, %c0_100] : memref<66x24xf32, #tpu.memory_space<vmem>>, vector<1x24xf32>
    tpu.vector_store %arg7[%c17, %c0_100], %102 {strides = array<i32>} : memref<66x24xf32, #tpu.memory_space<vmem>>, vector<1x24xf32>,
    %c6_101 = arith.constant 6 : index
    %c36_102 = arith.constant 36 : index
    %104 = vector.load %arg6[%c6_101, %c36_102] : memref<24x66xf32, #tpu.memory_space<vmem>>, vector<1x24xf32>
    %c18_103 = arith.constant 18 : index
    %c0_104 = arith.constant 0 : index
    %105 = vector.load %arg7[%c18_103, %c0_104] : memref<66x24xf32, #tpu.memory_space<vmem>>, vector<1x24xf32>
    tpu.vector_store %arg7[%c18_103, %c0_104], %104 {strides = array<i32>} : memref<66x24xf32, #tpu.memory_space<vmem>>, vector<1x24xf32>,
    %c6_105 = arith.constant 6 : index
    %c60_106 = arith.constant 60 : index
    %106 = vector.load %arg6[%c6_105, %c60_106] : memref<24x66xf32, #tpu.memory_space<vmem>>, vector<1x6xf32>
    %c19 = arith.constant 19 : index
    %c0_107 = arith.constant 0 : index
    %107 = vector.load %arg7[%c19, %c0_107] : memref<66x24xf32, #tpu.memory_space<vmem>>, vector<1x6xf32>
    tpu.vector_store %arg7[%c19, %c0_107], %106 {strides = array<i32>} : memref<66x24xf32, #tpu.memory_space<vmem>>, vector<1x6xf32>,
    %c7_108 = arith.constant 7 : index
    %c0_109 = arith.constant 0 : index
    %108 = vector.load %arg6[%c7_108, %c0_109] : memref<24x66xf32, #tpu.memory_space<vmem>>, vector<1x18xf32>
    %c19_110 = arith.constant 19 : index
    %c6_111 = arith.constant 6 : index
    %109 = vector.load %arg7[%c19_110, %c6_111] : memref<66x24xf32, #tpu.memory_space<vmem>>, vector<1x18xf32>
    tpu.vector_store %arg7[%c19_110, %c6_111], %108 {strides = array<i32>} : memref<66x24xf32, #tpu.memory_space<vmem>>, vector<1x18xf32>,
    %c7_112 = arith.constant 7 : index
    %c18_113 = arith.constant 18 : index
    %110 = vector.load %arg6[%c7_112, %c18_113] : memref<24x66xf32, #tpu.memory_space<vmem>>, vector<1x24xf32>
    %c20 = arith.constant 20 : index
    %c0_114 = arith.constant 0 : index
    %111 = vector.load %arg7[%c20, %c0_114] : memref<66x24xf32, #tpu.memory_space<vmem>>, vector<1x24xf32>
    tpu.vector_store %arg7[%c20, %c0_114], %110 {strides = array<i32>} : memref<66x24xf32, #tpu.memory_space<vmem>>, vector<1x24xf32>,
    %c7_115 = arith.constant 7 : index
    %c42_116 = arith.constant 42 : index
    %112 = vector.load %arg6[%c7_115, %c42_116] : memref<24x66xf32, #tpu.memory_space<vmem>>, vector<1x24xf32>
    %c21 = arith.constant 21 : index
    %c0_117 = arith.constant 0 : index
    %113 = vector.load %arg7[%c21, %c0_117] : memref<66x24xf32, #tpu.memory_space<vmem>>, vector<1x24xf32>
    tpu.vector_store %arg7[%c21, %c0_117], %112 {strides = array<i32>} : memref<66x24xf32, #tpu.memory_space<vmem>>, vector<1x24xf32>,
    %c8_118 = arith.constant 8 : index
    %c0_119 = arith.constant 0 : index
    %114 = vector.load %arg6[%c8_118, %c0_119] : memref<24x66xf32, #tpu.memory_space<vmem>>, vector<1x24xf32>
    %c22 = arith.constant 22 : index
    %c0_120 = arith.constant 0 : index
    %115 = vector.load %arg7[%c22, %c0_120] : memref<66x24xf32, #tpu.memory_space<vmem>>, vector<1x24xf32>
    tpu.vector_store %arg7[%c22, %c0_120], %114 {strides = array<i32>} : memref<66x24xf32, #tpu.memory_space<vmem>>, vector<1x24xf32>,
    %c8_121 = arith.constant 8 : index
    %c24_122 = arith.constant 24 : index
    %116 = vector.load %arg6[%c8_121, %c24_122] : memref<24x66xf32, #tpu.memory_space<vmem>>, vector<1x24xf32>
    %c23 = arith.constant 23 : index
    %c0_123 = arith.constant 0 : index
    %117 = vector.load %arg7[%c23, %c0_123] : memref<66x24xf32, #tpu.memory_space<vmem>>, vector<1x24xf32>
    tpu.vector_store %arg7[%c23, %c0_123], %116 {strides = array<i32>} : memref<66x24xf32, #tpu.memory_space<vmem>>, vector<1x24xf32>,
    %c8_124 = arith.constant 8 : index
    %c48_125 = arith.constant 48 : index
    %118 = vector.load %arg6[%c8_124, %c48_125] : memref<24x66xf32, #tpu.memory_space<vmem>>, vector<1x18xf32>
    %c24_126 = arith.constant 24 : index
    %c0_127 = arith.constant 0 : index
    %119 = vector.load %arg7[%c24_126, %c0_127] : memref<66x24xf32, #tpu.memory_space<vmem>>, vector<1x18xf32>
    tpu.vector_store %arg7[%c24_126, %c0_127], %118 {strides = array<i32>} : memref<66x24xf32, #tpu.memory_space<vmem>>, vector<1x18xf32>,
    %c9_128 = arith.constant 9 : index
    %c0_129 = arith.constant 0 : index
    %120 = vector.load %arg6[%c9_128, %c0_129] : memref<24x66xf32, #tpu.memory_space<vmem>>, vector<1x6xf32>
    %c24_130 = arith.constant 24 : index
    %c18_131 = arith.constant 18 : index
    %121 = vector.load %arg7[%c24_130, %c18_131] : memref<66x24xf32, #tpu.memory_space<vmem>>, vector<1x6xf32>
    tpu.vector_store %arg7[%c24_130, %c18_131], %120 {strides = array<i32>} : memref<66x24xf32, #tpu.memory_space<vmem>>, vector<1x6xf32>,
    %c9_132 = arith.constant 9 : index
    %c6_133 = arith.constant 6 : index
    %122 = vector.load %arg6[%c9_132, %c6_133] : memref<24x66xf32, #tpu.memory_space<vmem>>, vector<1x24xf32>
    %c25 = arith.constant 25 : index
    %c0_134 = arith.constant 0 : index
    %123 = vector.load %arg7[%c25, %c0_134] : memref<66x24xf32, #tpu.memory_space<vmem>>, vector<1x24xf32>
    tpu.vector_store %arg7[%c25, %c0_134], %122 {strides = array<i32>} : memref<66x24xf32, #tpu.memory_space<vmem>>, vector<1x24xf32>,
    %c9_135 = arith.constant 9 : index
    %c30_136 = arith.constant 30 : index
    %124 = vector.load %arg6[%c9_135, %c30_136] : memref<24x66xf32, #tpu.memory_space<vmem>>, vector<1x24xf32>
    %c26 = arith.constant 26 : index
    %c0_137 = arith.constant 0 : index
    %125 = vector.load %arg7[%c26, %c0_137] : memref<66x24xf32, #tpu.memory_space<vmem>>, vector<1x24xf32>
    tpu.vector_store %arg7[%c26, %c0_137], %124 {strides = array<i32>} : memref<66x24xf32, #tpu.memory_space<vmem>>, vector<1x24xf32>,
    %c9_138 = arith.constant 9 : index
    %c54_139 = arith.constant 54 : index
    %126 = vector.load %arg6[%c9_138, %c54_139] : memref<24x66xf32, #tpu.memory_space<vmem>>, vector<1x12xf32>
    %c27 = arith.constant 27 : index
    %c0_140 = arith.constant 0 : index
    %127 = vector.load %arg7[%c27, %c0_140] : memref<66x24xf32, #tpu.memory_space<vmem>>, vector<1x12xf32>
    tpu.vector_store %arg7[%c27, %c0_140], %126 {strides = array<i32>} : memref<66x24xf32, #tpu.memory_space<vmem>>, vector<1x12xf32>,
    %c10_141 = arith.constant 10 : index
    %c0_142 = arith.constant 0 : index
    %128 = vector.load %arg6[%c10_141, %c0_142] : memref<24x66xf32, #tpu.memory_space<vmem>>, vector<1x12xf32>
    %c27_143 = arith.constant 27 : index
    %c12_144 = arith.constant 12 : index
    %129 = vector.load %arg7[%c27_143, %c12_144] : memref<66x24xf32, #tpu.memory_space<vmem>>, vector<1x12xf32>
    tpu.vector_store %arg7[%c27_143, %c12_144], %128 {strides = array<i32>} : memref<66x24xf32, #tpu.memory_space<vmem>>, vector<1x12xf32>,
    %c10_145 = arith.constant 10 : index
    %c12_146 = arith.constant 12 : index
    %130 = vector.load %arg6[%c10_145, %c12_146] : memref<24x66xf32, #tpu.memory_space<vmem>>, vector<1x24xf32>
    %c28 = arith.constant 28 : index
    %c0_147 = arith.constant 0 : index
    %131 = vector.load %arg7[%c28, %c0_147] : memref<66x24xf32, #tpu.memory_space<vmem>>, vector<1x24xf32>
    tpu.vector_store %arg7[%c28, %c0_147], %130 {strides = array<i32>} : memref<66x24xf32, #tpu.memory_space<vmem>>, vector<1x24xf32>,
    %c10_148 = arith.constant 10 : index
    %c36_149 = arith.constant 36 : index
    %132 = vector.load %arg6[%c10_148, %c36_149] : memref<24x66xf32, #tpu.memory_space<vmem>>, vector<1x24xf32>
    %c29 = arith.constant 29 : index
    %c0_150 = arith.constant 0 : index
    %133 = vector.load %arg7[%c29, %c0_150] : memref<66x24xf32, #tpu.memory_space<vmem>>, vector<1x24xf32>
    tpu.vector_store %arg7[%c29, %c0_150], %132 {strides = array<i32>} : memref<66x24xf32, #tpu.memory_space<vmem>>, vector<1x24xf32>,
    %c10_151 = arith.constant 10 : index
    %c60_152 = arith.constant 60 : index
    %134 = vector.load %arg6[%c10_151, %c60_152] : memref<24x66xf32, #tpu.memory_space<vmem>>, vector<1x6xf32>
    %c30_153 = arith.constant 30 : index
    %c0_154 = arith.constant 0 : index
    %135 = vector.load %arg7[%c30_153, %c0_154] : memref<66x24xf32, #tpu.memory_space<vmem>>, vector<1x6xf32>
    tpu.vector_store %arg7[%c30_153, %c0_154], %134 {strides = array<i32>} : memref<66x24xf32, #tpu.memory_space<vmem>>, vector<1x6xf32>,
    %c11_155 = arith.constant 11 : index
    %c0_156 = arith.constant 0 : index
    %136 = vector.load %arg6[%c11_155, %c0_156] : memref<24x66xf32, #tpu.memory_space<vmem>>, vector<1x18xf32>
    %c30_157 = arith.constant 30 : index
    %c6_158 = arith.constant 6 : index
    %137 = vector.load %arg7[%c30_157, %c6_158] : memref<66x24xf32, #tpu.memory_space<vmem>>, vector<1x18xf32>
    tpu.vector_store %arg7[%c30_157, %c6_158], %136 {strides = array<i32>} : memref<66x24xf32, #tpu.memory_space<vmem>>, vector<1x18xf32>,
    %c11_159 = arith.constant 11 : index
    %c18_160 = arith.constant 18 : index
    %138 = vector.load %arg6[%c11_159, %c18_160] : memref<24x66xf32, #tpu.memory_space<vmem>>, vector<1x24xf32>
    %c31 = arith.constant 31 : index
    %c0_161 = arith.constant 0 : index
    %139 = vector.load %arg7[%c31, %c0_161] : memref<66x24xf32, #tpu.memory_space<vmem>>, vector<1x24xf32>
    tpu.vector_store %arg7[%c31, %c0_161], %138 {strides = array<i32>} : memref<66x24xf32, #tpu.memory_space<vmem>>, vector<1x24xf32>,
    %c11_162 = arith.constant 11 : index
    %c42_163 = arith.constant 42 : index
    %140 = vector.load %arg6[%c11_162, %c42_163] : memref<24x66xf32, #tpu.memory_space<vmem>>, vector<1x24xf32>
    %c32 = arith.constant 32 : index
    %c0_164 = arith.constant 0 : index
    %141 = vector.load %arg7[%c32, %c0_164] : memref<66x24xf32, #tpu.memory_space<vmem>>, vector<1x24xf32>
    tpu.vector_store %arg7[%c32, %c0_164], %140 {strides = array<i32>} : memref<66x24xf32, #tpu.memory_space<vmem>>, vector<1x24xf32>,
    %c12_165 = arith.constant 12 : index
    %c0_166 = arith.constant 0 : index
    %142 = vector.load %arg6[%c12_165, %c0_166] : memref<24x66xf32, #tpu.memory_space<vmem>>, vector<1x24xf32>
    %c33 = arith.constant 33 : index
    %c0_167 = arith.constant 0 : index
    %143 = vector.load %arg7[%c33, %c0_167] : memref<66x24xf32, #tpu.memory_space<vmem>>, vector<1x24xf32>
    tpu.vector_store %arg7[%c33, %c0_167], %142 {strides = array<i32>} : memref<66x24xf32, #tpu.memory_space<vmem>>, vector<1x24xf32>,
    %c12_168 = arith.constant 12 : index
    %c24_169 = arith.constant 24 : index
    %144 = vector.load %arg6[%c12_168, %c24_169] : memref<24x66xf32, #tpu.memory_space<vmem>>, vector<1x24xf32>
    %c34 = arith.constant 34 : index
    %c0_170 = arith.constant 0 : index
    %145 = vector.load %arg7[%c34, %c0_170] : memref<66x24xf32, #tpu.memory_space<vmem>>, vector<1x24xf32>
    tpu.vector_store %arg7[%c34, %c0_170], %144 {strides = array<i32>} : memref<66x24xf32, #tpu.memory_space<vmem>>, vector<1x24xf32>,
    %c12_171 = arith.constant 12 : index
    %c48_172 = arith.constant 48 : index
    %146 = vector.load %arg6[%c12_171, %c48_172] : memref<24x66xf32, #tpu.memory_space<vmem>>, vector<1x18xf32>
    %c35 = arith.constant 35 : index
    %c0_173 = arith.constant 0 : index
    %147 = vector.load %arg7[%c35, %c0_173] : memref<66x24xf32, #tpu.memory_space<vmem>>, vector<1x18xf32>
    tpu.vector_store %arg7[%c35, %c0_173], %146 {strides = array<i32>} : memref<66x24xf32, #tpu.memory_space<vmem>>, vector<1x18xf32>,
    %c13_174 = arith.constant 13 : index
    %c0_175 = arith.constant 0 : index
    %148 = vector.load %arg6[%c13_174, %c0_175] : memref<24x66xf32, #tpu.memory_space<vmem>>, vector<1x6xf32>
    %c35_176 = arith.constant 35 : index
    %c18_177 = arith.constant 18 : index
    %149 = vector.load %arg7[%c35_176, %c18_177] : memref<66x24xf32, #tpu.memory_space<vmem>>, vector<1x6xf32>
    tpu.vector_store %arg7[%c35_176, %c18_177], %148 {strides = array<i32>} : memref<66x24xf32, #tpu.memory_space<vmem>>, vector<1x6xf32>,
    %c13_178 = arith.constant 13 : index
    %c6_179 = arith.constant 6 : index
    %150 = vector.load %arg6[%c13_178, %c6_179] : memref<24x66xf32, #tpu.memory_space<vmem>>, vector<1x24xf32>
    %c36_180 = arith.constant 36 : index
    %c0_181 = arith.constant 0 : index
    %151 = vector.load %arg7[%c36_180, %c0_181] : memref<66x24xf32, #tpu.memory_space<vmem>>, vector<1x24xf32>
    tpu.vector_store %arg7[%c36_180, %c0_181], %150 {strides = array<i32>} : memref<66x24xf32, #tpu.memory_space<vmem>>, vector<1x24xf32>,
    %c13_182 = arith.constant 13 : index
    %c30_183 = arith.constant 30 : index
    %152 = vector.load %arg6[%c13_182, %c30_183] : memref<24x66xf32, #tpu.memory_space<vmem>>, vector<1x24xf32>
    %c37 = arith.constant 37 : index
    %c0_184 = arith.constant 0 : index
    %153 = vector.load %arg7[%c37, %c0_184] : memref<66x24xf32, #tpu.memory_space<vmem>>, vector<1x24xf32>
    tpu.vector_store %arg7[%c37, %c0_184], %152 {strides = array<i32>} : memref<66x24xf32, #tpu.memory_space<vmem>>, vector<1x24xf32>,
    %c13_185 = arith.constant 13 : index
    %c54_186 = arith.constant 54 : index
    %154 = vector.load %arg6[%c13_185, %c54_186] : memref<24x66xf32, #tpu.memory_space<vmem>>, vector<1x12xf32>
    %c38 = arith.constant 38 : index
    %c0_187 = arith.constant 0 : index
    %155 = vector.load %arg7[%c38, %c0_187] : memref<66x24xf32, #tpu.memory_space<vmem>>, vector<1x12xf32>
    tpu.vector_store %arg7[%c38, %c0_187], %154 {strides = array<i32>} : memref<66x24xf32, #tpu.memory_space<vmem>>, vector<1x12xf32>,
    %c14_188 = arith.constant 14 : index
    %c0_189 = arith.constant 0 : index
    %156 = vector.load %arg6[%c14_188, %c0_189] : memref<24x66xf32, #tpu.memory_space<vmem>>, vector<1x12xf32>
    %c38_190 = arith.constant 38 : index
    %c12_191 = arith.constant 12 : index
    %157 = vector.load %arg7[%c38_190, %c12_191] : memref<66x24xf32, #tpu.memory_space<vmem>>, vector<1x12xf32>
    tpu.vector_store %arg7[%c38_190, %c12_191], %156 {strides = array<i32>} : memref<66x24xf32, #tpu.memory_space<vmem>>, vector<1x12xf32>,
    %c14_192 = arith.constant 14 : index
    %c12_193 = arith.constant 12 : index
    %158 = vector.load %arg6[%c14_192, %c12_193] : memref<24x66xf32, #tpu.memory_space<vmem>>, vector<1x24xf32>
    %c39 = arith.constant 39 : index
    %c0_194 = arith.constant 0 : index
    %159 = vector.load %arg7[%c39, %c0_194] : memref<66x24xf32, #tpu.memory_space<vmem>>, vector<1x24xf32>
    tpu.vector_store %arg7[%c39, %c0_194], %158 {strides = array<i32>} : memref<66x24xf32, #tpu.memory_space<vmem>>, vector<1x24xf32>,
    %c14_195 = arith.constant 14 : index
    %c36_196 = arith.constant 36 : index
    %160 = vector.load %arg6[%c14_195, %c36_196] : memref<24x66xf32, #tpu.memory_space<vmem>>, vector<1x24xf32>
    %c40 = arith.constant 40 : index
    %c0_197 = arith.constant 0 : index
    %161 = vector.load %arg7[%c40, %c0_197] : memref<66x24xf32, #tpu.memory_space<vmem>>, vector<1x24xf32>
    tpu.vector_store %arg7[%c40, %c0_197], %160 {strides = array<i32>} : memref<66x24xf32, #tpu.memory_space<vmem>>, vector<1x24xf32>,
    %c14_198 = arith.constant 14 : index
    %c60_199 = arith.constant 60 : index
    %162 = vector.load %arg6[%c14_198, %c60_199] : memref<24x66xf32, #tpu.memory_space<vmem>>, vector<1x6xf32>
    %c41 = arith.constant 41 : index
    %c0_200 = arith.constant 0 : index
    %163 = vector.load %arg7[%c41, %c0_200] : memref<66x24xf32, #tpu.memory_space<vmem>>, vector<1x6xf32>
    tpu.vector_store %arg7[%c41, %c0_200], %162 {strides = array<i32>} : memref<66x24xf32, #tpu.memory_space<vmem>>, vector<1x6xf32>,
    %c15_201 = arith.constant 15 : index
    %c0_202 = arith.constant 0 : index
    %164 = vector.load %arg6[%c15_201, %c0_202] : memref<24x66xf32, #tpu.memory_space<vmem>>, vector<1x18xf32>
    %c41_203 = arith.constant 41 : index
    %c6_204 = arith.constant 6 : index
    %165 = vector.load %arg7[%c41_203, %c6_204] : memref<66x24xf32, #tpu.memory_space<vmem>>, vector<1x18xf32>
    tpu.vector_store %arg7[%c41_203, %c6_204], %164 {strides = array<i32>} : memref<66x24xf32, #tpu.memory_space<vmem>>, vector<1x18xf32>,
    %c15_205 = arith.constant 15 : index
    %c18_206 = arith.constant 18 : index
    %166 = vector.load %arg6[%c15_205, %c18_206] : memref<24x66xf32, #tpu.memory_space<vmem>>, vector<1x24xf32>
    %c42_207 = arith.constant 42 : index
    %c0_208 = arith.constant 0 : index
    %167 = vector.load %arg7[%c42_207, %c0_208] : memref<66x24xf32, #tpu.memory_space<vmem>>, vector<1x24xf32>
    tpu.vector_store %arg7[%c42_207, %c0_208], %166 {strides = array<i32>} : memref<66x24xf32, #tpu.memory_space<vmem>>, vector<1x24xf32>,
    %c15_209 = arith.constant 15 : index
    %c42_210 = arith.constant 42 : index
    %168 = vector.load %arg6[%c15_209, %c42_210] : memref<24x66xf32, #tpu.memory_space<vmem>>, vector<1x24xf32>
    %c43 = arith.constant 43 : index
    %c0_211 = arith.constant 0 : index
    %169 = vector.load %arg7[%c43, %c0_211] : memref<66x24xf32, #tpu.memory_space<vmem>>, vector<1x24xf32>
    tpu.vector_store %arg7[%c43, %c0_211], %168 {strides = array<i32>} : memref<66x24xf32, #tpu.memory_space<vmem>>, vector<1x24xf32>,
    %c16_212 = arith.constant 16 : index
    %c0_213 = arith.constant 0 : index
    %170 = vector.load %arg6[%c16_212, %c0_213] : memref<24x66xf32, #tpu.memory_space<vmem>>, vector<1x24xf32>
    %c44 = arith.constant 44 : index
    %c0_214 = arith.constant 0 : index
    %171 = vector.load %arg7[%c44, %c0_214] : memref<66x24xf32, #tpu.memory_space<vmem>>, vector<1x24xf32>
    tpu.vector_store %arg7[%c44, %c0_214], %170 {strides = array<i32>} : memref<66x24xf32, #tpu.memory_space<vmem>>, vector<1x24xf32>,
    %c16_215 = arith.constant 16 : index
    %c24_216 = arith.constant 24 : index
    %172 = vector.load %arg6[%c16_215, %c24_216] : memref<24x66xf32, #tpu.memory_space<vmem>>, vector<1x24xf32>
    %c45 = arith.constant 45 : index
    %c0_217 = arith.constant 0 : index
    %173 = vector.load %arg7[%c45, %c0_217] : memref<66x24xf32, #tpu.memory_space<vmem>>, vector<1x24xf32>
    tpu.vector_store %arg7[%c45, %c0_217], %172 {strides = array<i32>} : memref<66x24xf32, #tpu.memory_space<vmem>>, vector<1x24xf32>,
    %c16_218 = arith.constant 16 : index
    %c48_219 = arith.constant 48 : index
    %174 = vector.load %arg6[%c16_218, %c48_219] : memref<24x66xf32, #tpu.memory_space<vmem>>, vector<1x18xf32>
    %c46 = arith.constant 46 : index
    %c0_220 = arith.constant 0 : index
    %175 = vector.load %arg7[%c46, %c0_220] : memref<66x24xf32, #tpu.memory_space<vmem>>, vector<1x18xf32>
    tpu.vector_store %arg7[%c46, %c0_220], %174 {strides = array<i32>} : memref<66x24xf32, #tpu.memory_space<vmem>>, vector<1x18xf32>,
    %c17_221 = arith.constant 17 : index
    %c0_222 = arith.constant 0 : index
    %176 = vector.load %arg6[%c17_221, %c0_222] : memref<24x66xf32, #tpu.memory_space<vmem>>, vector<1x6xf32>
    %c46_223 = arith.constant 46 : index
    %c18_224 = arith.constant 18 : index
    %177 = vector.load %arg7[%c46_223, %c18_224] : memref<66x24xf32, #tpu.memory_space<vmem>>, vector<1x6xf32>
    tpu.vector_store %arg7[%c46_223, %c18_224], %176 {strides = array<i32>} : memref<66x24xf32, #tpu.memory_space<vmem>>, vector<1x6xf32>,
    %c17_225 = arith.constant 17 : index
    %c6_226 = arith.constant 6 : index
    %178 = vector.load %arg6[%c17_225, %c6_226] : memref<24x66xf32, #tpu.memory_space<vmem>>, vector<1x24xf32>
    %c47 = arith.constant 47 : index
    %c0_227 = arith.constant 0 : index
    %179 = vector.load %arg7[%c47, %c0_227] : memref<66x24xf32, #tpu.memory_space<vmem>>, vector<1x24xf32>
    tpu.vector_store %arg7[%c47, %c0_227], %178 {strides = array<i32>} : memref<66x24xf32, #tpu.memory_space<vmem>>, vector<1x24xf32>,
    %c17_228 = arith.constant 17 : index
    %c30_229 = arith.constant 30 : index
    %180 = vector.load %arg6[%c17_228, %c30_229] : memref<24x66xf32, #tpu.memory_space<vmem>>, vector<1x24xf32>
    %c48_230 = arith.constant 48 : index
    %c0_231 = arith.constant 0 : index
    %181 = vector.load %arg7[%c48_230, %c0_231] : memref<66x24xf32, #tpu.memory_space<vmem>>, vector<1x24xf32>
    tpu.vector_store %arg7[%c48_230, %c0_231], %180 {strides = array<i32>} : memref<66x24xf32, #tpu.memory_space<vmem>>, vector<1x24xf32>,
    %c17_232 = arith.constant 17 : index
    %c54_233 = arith.constant 54 : index
    %182 = vector.load %arg6[%c17_232, %c54_233] : memref<24x66xf32, #tpu.memory_space<vmem>>, vector<1x12xf32>
    %c49 = arith.constant 49 : index
    %c0_234 = arith.constant 0 : index
    %183 = vector.load %arg7[%c49, %c0_234] : memref<66x24xf32, #tpu.memory_space<vmem>>, vector<1x12xf32>
    tpu.vector_store %arg7[%c49, %c0_234], %182 {strides = array<i32>} : memref<66x24xf32, #tpu.memory_space<vmem>>, vector<1x12xf32>,
    %c18_235 = arith.constant 18 : index
    %c0_236 = arith.constant 0 : index
    %184 = vector.load %arg6[%c18_235, %c0_236] : memref<24x66xf32, #tpu.memory_space<vmem>>, vector<1x12xf32>
    %c49_237 = arith.constant 49 : index
    %c12_238 = arith.constant 12 : index
    %185 = vector.load %arg7[%c49_237, %c12_238] : memref<66x24xf32, #tpu.memory_space<vmem>>, vector<1x12xf32>
    tpu.vector_store %arg7[%c49_237, %c12_238], %184 {strides = array<i32>} : memref<66x24xf32, #tpu.memory_space<vmem>>, vector<1x12xf32>,
    %c18_239 = arith.constant 18 : index
    %c12_240 = arith.constant 12 : index
    %186 = vector.load %arg6[%c18_239, %c12_240] : memref<24x66xf32, #tpu.memory_space<vmem>>, vector<1x24xf32>
    %c50 = arith.constant 50 : index
    %c0_241 = arith.constant 0 : index
    %187 = vector.load %arg7[%c50, %c0_241] : memref<66x24xf32, #tpu.memory_space<vmem>>, vector<1x24xf32>
    tpu.vector_store %arg7[%c50, %c0_241], %186 {strides = array<i32>} : memref<66x24xf32, #tpu.memory_space<vmem>>, vector<1x24xf32>,
    %c18_242 = arith.constant 18 : index
    %c36_243 = arith.constant 36 : index
    %188 = vector.load %arg6[%c18_242, %c36_243] : memref<24x66xf32, #tpu.memory_space<vmem>>, vector<1x24xf32>
    %c51 = arith.constant 51 : index
    %c0_244 = arith.constant 0 : index
    %189 = vector.load %arg7[%c51, %c0_244] : memref<66x24xf32, #tpu.memory_space<vmem>>, vector<1x24xf32>
    tpu.vector_store %arg7[%c51, %c0_244], %188 {strides = array<i32>} : memref<66x24xf32, #tpu.memory_space<vmem>>, vector<1x24xf32>,
    %c18_245 = arith.constant 18 : index
    %c60_246 = arith.constant 60 : index
    %190 = vector.load %arg6[%c18_245, %c60_246] : memref<24x66xf32, #tpu.memory_space<vmem>>, vector<1x6xf32>
    %c52 = arith.constant 52 : index
    %c0_247 = arith.constant 0 : index
    %191 = vector.load %arg7[%c52, %c0_247] : memref<66x24xf32, #tpu.memory_space<vmem>>, vector<1x6xf32>
    tpu.vector_store %arg7[%c52, %c0_247], %190 {strides = array<i32>} : memref<66x24xf32, #tpu.memory_space<vmem>>, vector<1x6xf32>,
    %c19_248 = arith.constant 19 : index
    %c0_249 = arith.constant 0 : index
    %192 = vector.load %arg6[%c19_248, %c0_249] : memref<24x66xf32, #tpu.memory_space<vmem>>, vector<1x18xf32>
    %c52_250 = arith.constant 52 : index
    %c6_251 = arith.constant 6 : index
    %193 = vector.load %arg7[%c52_250, %c6_251] : memref<66x24xf32, #tpu.memory_space<vmem>>, vector<1x18xf32>
    tpu.vector_store %arg7[%c52_250, %c6_251], %192 {strides = array<i32>} : memref<66x24xf32, #tpu.memory_space<vmem>>, vector<1x18xf32>,
    %c19_252 = arith.constant 19 : index
    %c18_253 = arith.constant 18 : index
    %194 = vector.load %arg6[%c19_252, %c18_253] : memref<24x66xf32, #tpu.memory_space<vmem>>, vector<1x24xf32>
    %c53 = arith.constant 53 : index
    %c0_254 = arith.constant 0 : index
    %195 = vector.load %arg7[%c53, %c0_254] : memref<66x24xf32, #tpu.memory_space<vmem>>, vector<1x24xf32>
    tpu.vector_store %arg7[%c53, %c0_254], %194 {strides = array<i32>} : memref<66x24xf32, #tpu.memory_space<vmem>>, vector<1x24xf32>,
    %c19_255 = arith.constant 19 : index
    %c42_256 = arith.constant 42 : index
    %196 = vector.load %arg6[%c19_255, %c42_256] : memref<24x66xf32, #tpu.memory_space<vmem>>, vector<1x24xf32>
    %c54_257 = arith.constant 54 : index
    %c0_258 = arith.constant 0 : index
    %197 = vector.load %arg7[%c54_257, %c0_258] : memref<66x24xf32, #tpu.memory_space<vmem>>, vector<1x24xf32>
    tpu.vector_store %arg7[%c54_257, %c0_258], %196 {strides = array<i32>} : memref<66x24xf32, #tpu.memory_space<vmem>>, vector<1x24xf32>,
    %c20_259 = arith.constant 20 : index
    %c0_260 = arith.constant 0 : index
    %198 = vector.load %arg6[%c20_259, %c0_260] : memref<24x66xf32, #tpu.memory_space<vmem>>, vector<1x24xf32>
    %c55 = arith.constant 55 : index
    %c0_261 = arith.constant 0 : index
    %199 = vector.load %arg7[%c55, %c0_261] : memref<66x24xf32, #tpu.memory_space<vmem>>, vector<1x24xf32>
    tpu.vector_store %arg7[%c55, %c0_261], %198 {strides = array<i32>} : memref<66x24xf32, #tpu.memory_space<vmem>>, vector<1x24xf32>,
    %c20_262 = arith.constant 20 : index
    %c24_263 = arith.constant 24 : index
    %200 = vector.load %arg6[%c20_262, %c24_263] : memref<24x66xf32, #tpu.memory_space<vmem>>, vector<1x24xf32>
    %c56 = arith.constant 56 : index
    %c0_264 = arith.constant 0 : index
    %201 = vector.load %arg7[%c56, %c0_264] : memref<66x24xf32, #tpu.memory_space<vmem>>, vector<1x24xf32>
    tpu.vector_store %arg7[%c56, %c0_264], %200 {strides = array<i32>} : memref<66x24xf32, #tpu.memory_space<vmem>>, vector<1x24xf32>,
    %c20_265 = arith.constant 20 : index
    %c48_266 = arith.constant 48 : index
    %202 = vector.load %arg6[%c20_265, %c48_266] : memref<24x66xf32, #tpu.memory_space<vmem>>, vector<1x18xf32>
    %c57 = arith.constant 57 : index
    %c0_267 = arith.constant 0 : index
    %203 = vector.load %arg7[%c57, %c0_267] : memref<66x24xf32, #tpu.memory_space<vmem>>, vector<1x18xf32>
    tpu.vector_store %arg7[%c57, %c0_267], %202 {strides = array<i32>} : memref<66x24xf32, #tpu.memory_space<vmem>>, vector<1x18xf32>,
    %c21_268 = arith.constant 21 : index
    %c0_269 = arith.constant 0 : index
    %204 = vector.load %arg6[%c21_268, %c0_269] : memref<24x66xf32, #tpu.memory_space<vmem>>, vector<1x6xf32>
    %c57_270 = arith.constant 57 : index
    %c18_271 = arith.constant 18 : index
    %205 = vector.load %arg7[%c57_270, %c18_271] : memref<66x24xf32, #tpu.memory_space<vmem>>, vector<1x6xf32>
    tpu.vector_store %arg7[%c57_270, %c18_271], %204 {strides = array<i32>} : memref<66x24xf32, #tpu.memory_space<vmem>>, vector<1x6xf32>,
    %c21_272 = arith.constant 21 : index
    %c6_273 = arith.constant 6 : index
    %206 = vector.load %arg6[%c21_272, %c6_273] : memref<24x66xf32, #tpu.memory_space<vmem>>, vector<1x24xf32>
    %c58 = arith.constant 58 : index
    %c0_274 = arith.constant 0 : index
    %207 = vector.load %arg7[%c58, %c0_274] : memref<66x24xf32, #tpu.memory_space<vmem>>, vector<1x24xf32>
    tpu.vector_store %arg7[%c58, %c0_274], %206 {strides = array<i32>} : memref<66x24xf32, #tpu.memory_space<vmem>>, vector<1x24xf32>,
    %c21_275 = arith.constant 21 : index
    %c30_276 = arith.constant 30 : index
    %208 = vector.load %arg6[%c21_275, %c30_276] : memref<24x66xf32, #tpu.memory_space<vmem>>, vector<1x24xf32>
    %c59 = arith.constant 59 : index
    %c0_277 = arith.constant 0 : index
    %209 = vector.load %arg7[%c59, %c0_277] : memref<66x24xf32, #tpu.memory_space<vmem>>, vector<1x24xf32>
    tpu.vector_store %arg7[%c59, %c0_277], %208 {strides = array<i32>} : memref<66x24xf32, #tpu.memory_space<vmem>>, vector<1x24xf32>,
    %c21_278 = arith.constant 21 : index
    %c54_279 = arith.constant 54 : index
    %210 = vector.load %arg6[%c21_278, %c54_279] : memref<24x66xf32, #tpu.memory_space<vmem>>, vector<1x12xf32>
    %c60_280 = arith.constant 60 : index
    %c0_281 = arith.constant 0 : index
    %211 = vector.load %arg7[%c60_280, %c0_281] : memref<66x24xf32, #tpu.memory_space<vmem>>, vector<1x12xf32>
    tpu.vector_store %arg7[%c60_280, %c0_281], %210 {strides = array<i32>} : memref<66x24xf32, #tpu.memory_space<vmem>>, vector<1x12xf32>,
    %c22_282 = arith.constant 22 : index
    %c0_283 = arith.constant 0 : index
    %212 = vector.load %arg6[%c22_282, %c0_283] : memref<24x66xf32, #tpu.memory_space<vmem>>, vector<1x12xf32>
    %c60_284 = arith.constant 60 : index
    %c12_285 = arith.constant 12 : index
    %213 = vector.load %arg7[%c60_284, %c12_285] : memref<66x24xf32, #tpu.memory_space<vmem>>, vector<1x12xf32>
    tpu.vector_store %arg7[%c60_284, %c12_285], %212 {strides = array<i32>} : memref<66x24xf32, #tpu.memory_space<vmem>>, vector<1x12xf32>,
    %c22_286 = arith.constant 22 : index
    %c12_287 = arith.constant 12 : index
    %214 = vector.load %arg6[%c22_286, %c12_287] : memref<24x66xf32, #tpu.memory_space<vmem>>, vector<1x24xf32>
    %c61 = arith.constant 61 : index
    %c0_288 = arith.constant 0 : index
    %215 = vector.load %arg7[%c61, %c0_288] : memref<66x24xf32, #tpu.memory_space<vmem>>, vector<1x24xf32>
    tpu.vector_store %arg7[%c61, %c0_288], %214 {strides = array<i32>} : memref<66x24xf32, #tpu.memory_space<vmem>>, vector<1x24xf32>,
    %c22_289 = arith.constant 22 : index
    %c36_290 = arith.constant 36 : index
    %216 = vector.load %arg6[%c22_289, %c36_290] : memref<24x66xf32, #tpu.memory_space<vmem>>, vector<1x24xf32>
    %c62 = arith.constant 62 : index
    %c0_291 = arith.constant 0 : index
    %217 = vector.load %arg7[%c62, %c0_291] : memref<66x24xf32, #tpu.memory_space<vmem>>, vector<1x24xf32>
    tpu.vector_store %arg7[%c62, %c0_291], %216 {strides = array<i32>} : memref<66x24xf32, #tpu.memory_space<vmem>>, vector<1x24xf32>,
    %c22_292 = arith.constant 22 : index
    %c60_293 = arith.constant 60 : index
    %218 = vector.load %arg6[%c22_292, %c60_293] : memref<24x66xf32, #tpu.memory_space<vmem>>, vector<1x6xf32>
    %c63 = arith.constant 63 : index
    %c0_294 = arith.constant 0 : index
    %219 = vector.load %arg7[%c63, %c0_294] : memref<66x24xf32, #tpu.memory_space<vmem>>, vector<1x6xf32>
    tpu.vector_store %arg7[%c63, %c0_294], %218 {strides = array<i32>} : memref<66x24xf32, #tpu.memory_space<vmem>>, vector<1x6xf32>,
    %c23_295 = arith.constant 23 : index
    %c0_296 = arith.constant 0 : index
    %220 = vector.load %arg6[%c23_295, %c0_296] : memref<24x66xf32, #tpu.memory_space<vmem>>, vector<1x18xf32>
    %c63_297 = arith.constant 63 : index
    %c6_298 = arith.constant 6 : index
    %221 = vector.load %arg7[%c63_297, %c6_298] : memref<66x24xf32, #tpu.memory_space<vmem>>, vector<1x18xf32>
    tpu.vector_store %arg7[%c63_297, %c6_298], %220 {strides = array<i32>} : memref<66x24xf32, #tpu.memory_space<vmem>>, vector<1x18xf32>,
    %c23_299 = arith.constant 23 : index
    %c18_300 = arith.constant 18 : index
    %222 = vector.load %arg6[%c23_299, %c18_300] : memref<24x66xf32, #tpu.memory_space<vmem>>, vector<1x24xf32>
    %c64 = arith.constant 64 : index
    %c0_301 = arith.constant 0 : index
    %223 = vector.load %arg7[%c64, %c0_301] : memref<66x24xf32, #tpu.memory_space<vmem>>, vector<1x24xf32>
    tpu.vector_store %arg7[%c64, %c0_301], %222 {strides = array<i32>} : memref<66x24xf32, #tpu.memory_space<vmem>>, vector<1x24xf32>,
    %c23_302 = arith.constant 23 : index
    %c42_303 = arith.constant 42 : index
    %224 = vector.load %arg6[%c23_302, %c42_303] : memref<24x66xf32, #tpu.memory_space<vmem>>, vector<1x24xf32>
    %c65 = arith.constant 65 : index
    %c0_304 = arith.constant 0 : index
    %225 = vector.load %arg7[%c65, %c0_304] : memref<66x24xf32, #tpu.memory_space<vmem>>, vector<1x24xf32>
    tpu.vector_store %arg7[%c65, %c0_304], %224 {strides = array<i32>} : memref<66x24xf32, #tpu.memory_space<vmem>>, vector<1x24xf32>,
    %c0_305 = arith.constant 0 : index
    %c0_306 = arith.constant 0 : index
    %226 = vector.load %arg7[%c0_305, %c0_306] : memref<66x24xf32, #tpu.memory_space<vmem>>, vector<66x24xf32>
    %c0_307 = arith.constant 0 : index
    %c0_308 = arith.constant 0 : index
    %227 = vector.load %arg3[%c0_307, %c0_308] : memref<48x24xf32, #tpu.memory_space<vmem>>, vector<24x24xf32>
    %cst_309 = arith.constant dense<0.000000e+00> : vector<66x24xf32>
    %228 = tpu.matmul %226, %227, %cst_309 {dimension_numbers = #tpu.dot_dimension_numbers<[1], [0], [0], [1], [0, 0, 1, 1], [], []>} : vector<66x24xf32>, vector<24x24xf32>, vector<66x24xf32> -> vector<66x24xf32>
    %c0_310 = arith.constant 0 : index
    %c0_311 = arith.constant 0 : index
    %229 = vector.load %arg4[%c0_310, %c0_311] : memref<2x24xf32, #tpu.memory_space<vmem>>, vector<1x24xf32>
    %230 = vector.broadcast %229 : vector<1x24xf32> to vector<66x24xf32>
    %231 = arith.addf %228, %230 : vector<66x24xf32>
    %232 = math.tanh %231 : vector<66x24xf32>
    %c24_312 = arith.constant 24 : index
    %c0_313 = arith.constant 0 : index
    %233 = vector.load %arg3[%c24_312, %c0_313] : memref<48x24xf32, #tpu.memory_space<vmem>>, vector<24x24xf32>
    %cst_314 = arith.constant dense<0.000000e+00> : vector<66x24xf32>
    %234 = tpu.matmul %232, %233, %cst_314 {dimension_numbers = #tpu.dot_dimension_numbers<[1], [0], [0], [1], [0, 0, 1, 1], [], []>} : vector<66x24xf32>, vector<24x24xf32>, vector<66x24xf32> -> vector<66x24xf32>
    %c1_315 = arith.constant 1 : index
    %c0_316 = arith.constant 0 : index
    %235 = vector.load %arg4[%c1_315, %c0_316] : memref<2x24xf32, #tpu.memory_space<vmem>>, vector<1x24xf32>
    %236 = vector.broadcast %235 : vector<1x24xf32> to vector<66x24xf32>
    %237 = arith.addf %234, %236 : vector<66x24xf32>
    %238 = math.tanh %237 : vector<66x24xf32>
    %c0_317 = arith.constant 0 : index
    %c0_318 = arith.constant 0 : index
    %239 = vector.load %arg5[%c0_317, %c0_318] : memref<66x24xf32, #tpu.memory_space<vmem>>, vector<66x24xf32>
    tpu.vector_store %arg5[%c0_317, %c0_318], %238 {strides = array<i32>} : memref<66x24xf32, #tpu.memory_space<vmem>>, vector<66x24xf32>,
    return
  }
}

</mosaic_0001>

<llo_original>
// kernel: mod_forward.1
$region0: #{mod_forward.1}
  #allocation0 [shape = 'u32[]', space=smem, size = 0x4, offset = 0x4, fixed_abs, tag = 'smem constant byte address 0x4 - core index']
  #allocation1 [shape = 'u32[144,128]{1,0:T(1,128)}', space=vmem, size = 0x12000, scoped, tag = 'internal scratch']
  #allocation2 [shape = 'f32[24,66]{1,0:T(8,128)}', space=vmem, size = 0x3000, scoped, tag = 'scratch operand']
  #allocation3 [shape = 'f32[66,24]{1,0:T(8,128)}', space=vmem, size = 0x9000, scoped, tag = 'scratch operand']
  %s0 = inlined_call_operand.vmem [shape: f32[24,128], index: 0, kind: input, shape index: {}]
  %s1 = inlined_call_operand.vmem [shape: f32[72,24], index: 1, kind: input, shape index: {}]
  %s2 = inlined_call_operand.vmem [shape: f32[24,1], index: 2, kind: input, shape index: {}]
  %s3 = inlined_call_operand.vmem [shape: f32[48,24], index: 3, kind: input, shape index: {}]
  %s4 = inlined_call_operand.vmem [shape: f32[2,24], index: 4, kind: input, shape index: {}]
  %s5 = inlined_call_operand.vmem [shape: f32[66,24], index: 5, kind: output, shape index: {}]
  %s6 = sld [smem:[#allocation0]]
  $region30: #{mod_forward.1} parent=0
    _
  %s8 = ssub.s32 1, %s6
  %s9 = scalar_select 0, %s8, %s6
  // Predicated region
  $region2: #{mod_forward.1} parent=0 // pred_check
    _
  $region3: #{mod_forward.1} parent=0 // pred_check_branch
    %11 = sbr.rel (0) target = $region5
  $region4: #{mod_forward.1} parent=0 // pred_region
    _
  $region5: #{mod_forward.1} parent=0 // pred_fallthru
    _
  // Predicated region
  $region6: #{mod_forward.1} parent=0 // pred_check
    _
  $region7: #{mod_forward.1} parent=0 // pred_check_branch
    %13 = sbr.rel (0) target = $region9
  $region8: #{mod_forward.1} parent=0 // pred_region
    _
  $region9: #{mod_forward.1} parent=0 // pred_fallthru
    _
  // Predicated region
  $region10: #{mod_forward.1} parent=0 // pred_check
    _
  $region11: #{mod_forward.1} parent=0 // pred_check_branch
    %15 = sbr.rel (0) target = $region13
  $region12: #{mod_forward.1} parent=0 // pred_region
    _
  $region13: #{mod_forward.1} parent=0 // pred_fallthru
    _
  // Predicated region
  $region14: #{mod_forward.1} parent=0 // pred_check
    _
  $region15: #{mod_forward.1} parent=0 // pred_check_branch
    %17 = sbr.rel (0) target = $region17
  $region16: #{mod_forward.1} parent=0 // pred_region
    _
  $region17: #{mod_forward.1} parent=0 // pred_fallthru
    _
  // Predicated region
  $region18: #{mod_forward.1} parent=0 // pred_check
    _
  $region19: #{mod_forward.1} parent=0 // pred_check_branch
    %19 = sbr.rel (0) target = $region21
  $region20: #{mod_forward.1} parent=0 // pred_region
    _
  $region21: #{mod_forward.1} parent=0 // pred_fallthru
    _
  %v20 = vld [vmem:[%s0] sm:$0xff]
  %v21 = vld [vmem:[%s0 + $0x8] sm:$0xff]
  %v22 = vld [vmem:[%s0 + $0x10] sm:$0xff]
  %v23 = vld [vmem:[%s2] sm:$0xff]
  %v24 = vld [vmem:[%s2 + $0x8] sm:$0xff]
  %v25 = vld [vmem:[%s2 + $0x10] sm:$0xff]
  %v26 = vld [vmem:[%s1] sm:$0xff]
  %v27 = vld [vmem:[%s1 + $0x8] sm:$0xff]
  %v28 = vld [vmem:[%s1 + $0x10] sm:$0xff]
  %vm29 = vcmask 195584
  %v31 = vsel %vm29, %v26, 0
  %v34 = vsel %vm29, %v27, 0
  %v37 = vsel %vm29, %v28, 0
  %39 = vmatprep.subr.mxu0 0.0
  %40 = vmatpush1.msra.mxu0 0.0
  %41 = vmatprep.subr.mxu0 0.0
  %42 = vmatpush1.msra.mxu0 0.0
  %43 = vmatprep.subr.mxu0 0.0
  %44 = vmatpush1.msra.mxu0 0.0
  %45 = vmatprep.subr.mxu0 0.0
  %46 = vmatpush1.msra.mxu0 0.0
  %47 = vmatprep.subr.mxu0 0.0
  %48 = vmatpush1.msra.mxu0 0.0
  %49 = vmatprep.subr.mxu0 0.0
  %50 = vmatpush1.msra.mxu0 0.0
  %51 = vmatprep.subr.mxu0 0.0
  %52 = vmatpush1.msra.mxu0 0.0
  %53 = vmatprep.subr.mxu0 0.0
  %54 = vmatpush1.msra.mxu0 0.0
  %55 = vmatprep.subr.mxu0 0.0
  %56 = vmatpush1.msra.mxu0 0.0
  %57 = vmatprep.subr.mxu0 0.0
  %58 = vmatpush1.msra.mxu0 0.0
  %59 = vmatprep.subr.mxu0 0.0
  %60 = vmatpush1.msra.mxu0 0.0
  %61 = vmatprep.subr.mxu0 0.0
  %62 = vmatpush1.msra.mxu0 0.0
  %63 = vmatprep.subr.mxu0 0.0
  %64 = vmatpush1.msra.mxu0 0.0
  %65 = vmatprep.subr.mxu0 0.0
  %66 = vmatpush1.msra.mxu0 %v22
  %67 = vmatprep.subr.mxu0 0.0
  %68 = vmatpush1.msra.mxu0 %v21
  %69 = vmatprep.subr.mxu0 0.0
  %70 = vmatpush1.msra.mxu0 %v20
  %71 = vmatprep.subr.mxu0 0.0
  %72 = vmatpush2.msra.mxu0 0.0
  %73 = vmatprep.subr.mxu0 0.0
  %74 = vmatpush2.msra.mxu0 0.0
  %75 = vmatprep.subr.mxu0 0.0
  %76 = vmatpush2.msra.mxu0 0.0
  %77 = vmatprep.subr.mxu0 0.0
  %78 = vmatpush2.msra.mxu0 0.0
  %79 = vmatprep.subr.mxu0 0.0
  %80 = vmatpush2.msra.mxu0 0.0
  %81 = vmatprep.subr.mxu0 0.0
  %82 = vmatpush2.msra.mxu0 0.0
  %83 = vmatprep.subr.mxu0 0.0
  %84 = vmatpush2.msra.mxu0 0.0
  %85 = vmatprep.subr.mxu0 0.0
  %86 = vmatpush2.msra.mxu0 0.0
  %87 = vmatprep.subr.mxu0 0.0
  %88 = vmatpush2.msra.mxu0 0.0
  %89 = vmatprep.subr.mxu0 0.0
  %90 = vmatpush2.msra.mxu0 0.0
  %91 = vmatprep.subr.mxu0 0.0
  %92 = vmatpush2.msra.mxu0 0.0
  %93 = vmatprep.subr.mxu0 0.0
  %94 = vmatpush2.msra.mxu0 0.0
  %95 = vmatprep.subr.mxu0 0.0
  %96 = vmatpush2.msra.mxu0 0.0
  %97 = vmatprep.subr.mxu0 0.0
  %98 = vmatpush2.msra.mxu0 0.0
  %99 = vmatprep.subr.mxu0 0.0
  %100 = vmatpush2.msra.mxu0 0.0
  %101 = vmatprep.subr.mxu0 0.0
  %102 = vmatpush2.msra.mxu0 0.0
  %103 = vmatprep.mubr.f32.mxu0 0.0
  %104 = vmatmul.mubr.f32.gmra.mxu0 %v31
  %v105 = vpop.f32.mrf.mxu0
  %v106 = vadd.f32 0.0, %v105
  %v107 = vpop.f32.mrf.mxu0
  %108 = vmatprep.mubr.f32.mxu0 0.0
  %109 = vmatmul.mubr.f32.gmra.mxu0 %v34
  %v110 = vpop.f32.mrf.mxu0
  %v111 = vadd.f32 0.0, %v110
  %v112 = vpop.f32.mrf.mxu0
  %113 = vmatprep.mubr.f32.mxu0 0.0
  %114 = vmatmul.mubr.f32.gmra.mxu0 %v37
  %v115 = vpop.f32.mrf.mxu0
  %v116 = vadd.f32 0.0, %v115
  %v117 = vpop.f32.mrf.mxu0
  %118 = vdwg.mxu0
  %120 = vset.pattern.permute.xlu0 0
  %121 = vperm.xlu0 %120, %v23
  %v122 = vpop.permute.xlu0 %121
  %125 = vset.pattern.permute.xlu0 0
  %126 = vperm.xlu0 %125, %v24
  %v127 = vpop.permute.xlu0 %126
  %130 = vset.pattern.permute.xlu0 0
  %131 = vperm.xlu0 %130, %v25
  %v132 = vpop.permute.xlu0 %131
  %v134 = vadd.f32 %v122, %v106
  %v135 = vadd.f32 %v127, %v111
  %v136 = vadd.f32 %v132, %v116
  %v137 = vld [vmem:[%s1 + $0x18] sm:$0xff]
  %v138 = vld [vmem:[%s1 + $0x20] sm:$0xff]
  %v139 = vld [vmem:[%s1 + $0x28] sm:$0xff]
  %143 = vrot.lane.b32.xlu0 %v20, 127
  %v144 = vpop.permute.xlu0 %143
  %145 = vrot.lane.b32.xlu0 %v21, 127
  %v146 = vpop.permute.xlu0 %145
  %147 = vrot.lane.b32.xlu0 %v22, 127
  %v148 = vpop.permute.xlu0 %147
  %v153 = vsel %vm29, %v137, 0
  %v156 = vsel %vm29, %v138, 0
  %v159 = vsel %vm29, %v139, 0
  %161 = vmatprep.subr.mxu0 0.0
  %162 = vmatpush1.msra.mxu0 0.0
  %163 = vmatprep.subr.mxu0 0.0
  %164 = vmatpush1.msra.mxu0 0.0
  %165 = vmatprep.subr.mxu0 0.0
  %166 = vmatpush1.msra.mxu0 0.0
  %167 = vmatprep.subr.mxu0 0.0
  %168 = vmatpush1.msra.mxu0 0.0
  %169 = vmatprep.subr.mxu0 0.0
  %170 = vmatpush1.msra.mxu0 0.0
  %171 = vmatprep.subr.mxu0 0.0
  %172 = vmatpush1.msra.mxu0 0.0
  %173 = vmatprep.subr.mxu0 0.0
  %174 = vmatpush1.msra.mxu0 0.0
  %175 = vmatprep.subr.mxu0 0.0
  %176 = vmatpush1.msra.mxu0 0.0
  %177 = vmatprep.subr.mxu0 0.0
  %178 = vmatpush1.msra.mxu0 0.0
  %179 = vmatprep.subr.mxu0 0.0
  %180 = vmatpush1.msra.mxu0 0.0
  %181 = vmatprep.subr.mxu0 0.0
  %182 = vmatpush1.msra.mxu0 0.0
  %183 = vmatprep.subr.mxu0 0.0
  %184 = vmatpush1.msra.mxu0 0.0
  %185 = vmatprep.subr.mxu0 0.0
  %186 = vmatpush1.msra.mxu0 0.0
  %187 = vmatprep.subr.mxu0 0.0
  %188 = vmatpush1.msra.mxu0 %v148
  %189 = vmatprep.subr.mxu0 0.0
  %190 = vmatpush1.msra.mxu0 %v146
  %191 = vmatprep.subr.mxu0 0.0
  %192 = vmatpush1.msra.mxu0 %v144
  %193 = vmatprep.subr.mxu0 0.0
  %194 = vmatpush2.msra.mxu0 0.0
  %195 = vmatprep.subr.mxu0 0.0
  %196 = vmatpush2.msra.mxu0 0.0
  %197 = vmatprep.subr.mxu0 0.0
  %198 = vmatpush2.msra.mxu0 0.0
  %199 = vmatprep.subr.mxu0 0.0
  %200 = vmatpush2.msra.mxu0 0.0
  %201 = vmatprep.subr.mxu0 0.0
  %202 = vmatpush2.msra.mxu0 0.0
  %203 = vmatprep.subr.mxu0 0.0
  %204 = vmatpush2.msra.mxu0 0.0
  %205 = vmatprep.subr.mxu0 0.0
  %206 = vmatpush2.msra.mxu0 0.0
  %207 = vmatprep.subr.mxu0 0.0
  %208 = vmatpush2.msra.mxu0 0.0
  %209 = vmatprep.subr.mxu0 0.0
  %210 = vmatpush2.msra.mxu0 0.0
  %211 = vmatprep.subr.mxu0 0.0
  %212 = vmatpush2.msra.mxu0 0.0
  %213 = vmatprep.subr.mxu0 0.0
  %214 = vmatpush2.msra.mxu0 0.0
  %215 = vmatprep.subr.mxu0 0.0
  %216 = vmatpush2.msra.mxu0 0.0
  %217 = vmatprep.subr.mxu0 0.0
  %218 = vmatpush2.msra.mxu0 0.0
  %219 = vmatprep.subr.mxu0 0.0
  %220 = vmatpush2.msra.mxu0 0.0
  %221 = vmatprep.subr.mxu0 0.0
  %222 = vmatpush2.msra.mxu0 0.0
  %223 = vmatprep.subr.mxu0 0.0
  %224 = vmatpush2.msra.mxu0 0.0
  %225 = vmatprep.mubr.f32.mxu0 0.0
  %226 = vmatmul.mubr.f32.gmra.mxu0 %v153
  %v227 = vpop.f32.mrf.mxu0
  %v228 = vadd.f32 0.0, %v227
  %v229 = vpop.f32.mrf.mxu0
  %230 = vmatprep.mubr.f32.mxu0 0.0
  %231 = vmatmul.mubr.f32.gmra.mxu0 %v156
  %v232 = vpop.f32.mrf.mxu0
  %v233 = vadd.f32 0.0, %v232
  %v234 = vpop.f32.mrf.mxu0
  %235 = vmatprep.mubr.f32.mxu0 0.0
  %236 = vmatmul.mubr.f32.gmra.mxu0 %v159
  %v237 = vpop.f32.mrf.mxu0
  %v238 = vadd.f32 0.0, %v237
  %v239 = vpop.f32.mrf.mxu0
  %240 = vdwg.mxu0
  %v241 = vadd.f32 %v134, %v228
  %v242 = vadd.f32 %v135, %v233
  %v243 = vadd.f32 %v136, %v238
  %v244 = vld [vmem:[%s1 + $0x30] sm:$0xff]
  %v245 = vld [vmem:[%s1 + $0x38] sm:$0xff]
  %v246 = vld [vmem:[%s1 + $0x40] sm:$0xff]
  %247 = vrot.lane.b32.xlu0 %v20, 126
  %v248 = vpop.permute.xlu0 %247
  %249 = vrot.lane.b32.xlu0 %v21, 126
  %v250 = vpop.permute.xlu0 %249
  %251 = vrot.lane.b32.xlu0 %v22, 126
  %v252 = vpop.permute.xlu0 %251
  %v257 = vsel %vm29, %v244, 0
  %v260 = vsel %vm29, %v245, 0
  %v263 = vsel %vm29, %v246, 0
  %265 = vmatprep.subr.mxu0 0.0
  %266 = vmatpush1.msra.mxu0 0.0
  %267 = vmatprep.subr.mxu0 0.0
  %268 = vmatpush1.msra.mxu0 0.0
  %269 = vmatprep.subr.mxu0 0.0
  %270 = vmatpush1.msra.mxu0 0.0
  %271 = vmatprep.subr.mxu0 0.0
  %272 = vmatpush1.msra.mxu0 0.0
  %273 = vmatprep.subr.mxu0 0.0
  %274 = vmatpush1.msra.mxu0 0.0
  %275 = vmatprep.subr.mxu0 0.0
  %276 = vmatpush1.msra.mxu0 0.0
  %277 = vmatprep.subr.mxu0 0.0
  %278 = vmatpush1.msra.mxu0 0.0
  %279 = vmatprep.subr.mxu0 0.0
  %280 = vmatpush1.msra.mxu0 0.0
  %281 = vmatprep.subr.mxu0 0.0
  %282 = vmatpush1.msra.mxu0 0.0
  %283 = vmatprep.subr.mxu0 0.0
  %284 = vmatpush1.msra.mxu0 0.0
  %285 = vmatprep.subr.mxu0 0.0
  %286 = vmatpush1.msra.mxu0 0.0
  %287 = vmatprep.subr.mxu0 0.0
  %288 = vmatpush1.msra.mxu0 0.0
  %289 = vmatprep.subr.mxu0 0.0
  %290 = vmatpush1.msra.mxu0 0.0
  %291 = vmatprep.subr.mxu0 0.0
  %292 = vmatpush1.msra.mxu0 %v252
  %293 = vmatprep.subr.mxu0 0.0
  %294 = vmatpush1.msra.mxu0 %v250
  %295 = vmatprep.subr.mxu0 0.0
  %296 = vmatpush1.msra.mxu0 %v248
  %297 = vmatprep.subr.mxu0 0.0
  %298 = vmatpush2.msra.mxu0 0.0
  %299 = vmatprep.subr.mxu0 0.0
  %300 = vmatpush2.msra.mxu0 0.0
  %301 = vmatprep.subr.mxu0 0.0
  %302 = vmatpush2.msra.mxu0 0.0
  %303 = vmatprep.subr.mxu0 0.0
  %304 = vmatpush2.msra.mxu0 0.0
  %305 = vmatprep.subr.mxu0 0.0
  %306 = vmatpush2.msra.mxu0 0.0
  %307 = vmatprep.subr.mxu0 0.0
  %308 = vmatpush2.msra.mxu0 0.0
  %309 = vmatprep.subr.mxu0 0.0
  %310 = vmatpush2.msra.mxu0 0.0
  %311 = vmatprep.subr.mxu0 0.0
  %312 = vmatpush2.msra.mxu0 0.0
  %313 = vmatprep.subr.mxu0 0.0
  %314 = vmatpush2.msra.mxu0 0.0
  %315 = vmatprep.subr.mxu0 0.0
  %316 = vmatpush2.msra.mxu0 0.0
  %317 = vmatprep.subr.mxu0 0.0
  %318 = vmatpush2.msra.mxu0 0.0
  %319 = vmatprep.subr.mxu0 0.0
  %320 = vmatpush2.msra.mxu0 0.0
  %321 = vmatprep.subr.mxu0 0.0
  %322 = vmatpush2.msra.mxu0 0.0
  %323 = vmatprep.subr.mxu0 0.0
  %324 = vmatpush2.msra.mxu0 0.0
  %325 = vmatprep.subr.mxu0 0.0
  %326 = vmatpush2.msra.mxu0 0.0
  %327 = vmatprep.subr.mxu0 0.0
  %328 = vmatpush2.msra.mxu0 0.0
  %329 = vmatprep.mubr.f32.mxu0 0.0
  %330 = vmatmul.mubr.f32.gmra.mxu0 %v257
  %v331 = vpop.f32.mrf.mxu0
  %v332 = vadd.f32 0.0, %v331
  %v333 = vpop.f32.mrf.mxu0
  %334 = vmatprep.mubr.f32.mxu0 0.0
  %335 = vmatmul.mubr.f32.gmra.mxu0 %v260
  %v336 = vpop.f32.mrf.mxu0
  %v337 = vadd.f32 0.0, %v336
  %v338 = vpop.f32.mrf.mxu0
  %339 = vmatprep.mubr.f32.mxu0 0.0
  %340 = vmatmul.mubr.f32.gmra.mxu0 %v263
  %v341 = vpop.f32.mrf.mxu0
  %v342 = vadd.f32 0.0, %v341
  %v343 = vpop.f32.mrf.mxu0
  %344 = vdwg.mxu0
  %v345 = vadd.f32 %v241, %v332
  %v346 = vadd.f32 %v242, %v337
  %v347 = vadd.f32 %v243, %v342
  %v348 = vxor.u32 %v345, 2147483648
  %v349 = vxor.u32 %v346, 2147483648
  %v350 = vxor.u32 %v347, 2147483648
  %v351 = vmul.f32 %v348, 1.442695
  %v352 = vpow.pop %v351
  %v353 = vmul.f32 %v349, 1.442695
  %v354 = vpow.pop %v353
  %v355 = vmul.f32 %v350, 1.442695
  %v356 = vpow.pop %v355
  %v357 = vadd.f32 %v352, 1.0
  %v358 = vadd.f32 %v354, 1.0
  %v359 = vadd.f32 %v356, 1.0
  %v360 = vrcp.pop %v357
  %v361 = vmul.f32 1.0, %v360
  %v362 = vrcp.pop %v358
  %v363 = vmul.f32 1.0, %v362
  %v364 = vrcp.pop %v359
  %v365 = vmul.f32 1.0, %v364
  %366 = vmatprep.subr.mxu0 0.0
  %367 = vmatpush1.msra.mxu0 0.0
  %368 = vmatprep.subr.mxu0 0.0
  %369 = vmatpush1.msra.mxu0 0.0
  %370 = vmatprep.subr.mxu0 0.0
  %371 = vmatpush1.msra.mxu0 0.0
  %372 = vmatprep.subr.mxu0 0.0
  %373 = vmatpush1.msra.mxu0 0.0
  %374 = vmatprep.subr.mxu0 0.0
  %375 = vmatpush1.msra.mxu0 0.0
  %376 = vmatprep.subr.mxu0 0.0
  %377 = vmatpush1.msra.mxu0 0.0
  %378 = vmatprep.subr.mxu0 0.0
  %379 = vmatpush1.msra.mxu0 0.0
  %380 = vmatprep.subr.mxu0 0.0
  %381 = vmatpush1.msra.mxu0 0.0
  %382 = vmatprep.subr.mxu0 0.0
  %383 = vmatpush1.msra.mxu0 0.0
  %384 = vmatprep.subr.mxu0 0.0
  %385 = vmatpush1.msra.mxu0 0.0
  %386 = vmatprep.subr.mxu0 0.0
  %387 = vmatpush1.msra.mxu0 0.0
  %388 = vmatprep.subr.mxu0 0.0
  %389 = vmatpush1.msra.mxu0 0.0
  %390 = vmatprep.subr.mxu0 0.0
  %391 = vmatpush1.msra.mxu0 0.0
  %392 = vmatprep.subr.mxu0 0.0
  %393 = vmatpush1.msra.mxu0 %v365
  %394 = vmatprep.subr.mxu0 0.0
  %395 = vmatpush1.msra.mxu0 %v363
  %396 = vmatprep.subr.mxu0 0.0
  %397 = vmatpush1.msra.mxu0 %v361
  %398 = vmatprep.subr.mxu0 0.0
  %399 = vmatpush2.msra.mxu0 0.0
  %400 = vmatprep.subr.mxu0 0.0
  %401 = vmatpush2.msra.mxu0 0.0
  %402 = vmatprep.subr.mxu0 0.0
  %403 = vmatpush2.msra.mxu0 0.0
  %404 = vmatprep.subr.mxu0 0.0
  %405 = vmatpush2.msra.mxu0 0.0
  %406 = vmatprep.subr.mxu0 0.0
  %407 = vmatpush2.msra.mxu0 0.0
  %408 = vmatprep.subr.mxu0 0.0
  %409 = vmatpush2.msra.mxu0 0.0
  %410 = vmatprep.subr.mxu0 0.0
  %411 = vmatpush2.msra.mxu0 0.0
  %412 = vmatprep.subr.mxu0 0.0
  %413 = vmatpush2.msra.mxu0 0.0
  %414 = vmatprep.subr.mxu0 0.0
  %415 = vmatpush2.msra.mxu0 0.0
  %416 = vmatprep.subr.mxu0 0.0
  %417 = vmatpush2.msra.mxu0 0.0
  %418 = vmatprep.subr.mxu0 0.0
  %419 = vmatpush2.msra.mxu0 0.0
  %420 = vmatprep.subr.mxu0 0.0
  %421 = vmatpush2.msra.mxu0 0.0
  %422 = vmatprep.subr.mxu0 0.0
  %423 = vmatpush2.msra.mxu0 0.0
  %424 = vmatprep.subr.mxu0 0.0
  %425 = vmatpush2.msra.mxu0 0.0
  %426 = vmatprep.subr.mxu0 0.0
  %427 = vmatpush2.msra.mxu0 0.0
  %428 = vmatprep.subr.mxu0 0.0
  %429 = vmatpush2.msra.mxu0 0.0
  %430 = vmatprep.mubr.f32.mxu0 0.0
  %431 = vmatmul.mubr.f32.gmra.mxu0 %v31
  %v432 = vpop.f32.mrf.mxu0
  %v433 = vadd.f32 0.0, %v432
  %v434 = vpop.f32.mrf.mxu0
  %435 = vmatprep.mubr.f32.mxu0 0.0
  %436 = vmatmul.mubr.f32.gmra.mxu0 %v34
  %v437 = vpop.f32.mrf.mxu0
  %v438 = vadd.f32 0.0, %v437
  %v439 = vpop.f32.mrf.mxu0
  %440 = vmatprep.mubr.f32.mxu0 0.0
  %441 = vmatmul.mubr.f32.gmra.mxu0 %v37
  %v442 = vpop.f32.mrf.mxu0
  %v443 = vadd.f32 0.0, %v442
  %v444 = vpop.f32.mrf.mxu0
  %445 = vdwg.mxu0
  %v446 = vadd.f32 %v122, %v433
  %v447 = vadd.f32 %v127, %v438
  %v448 = vadd.f32 %v132, %v443
  %452 = vrot.lane.b32.xlu0 %v361, 127
  %v453 = vpop.permute.xlu0 %452
  %454 = vrot.lane.b32.xlu0 %v363, 127
  %v455 = vpop.permute.xlu0 %454
  %456 = vrot.lane.b32.xlu0 %v365, 127
  %v457 = vpop.permute.xlu0 %456
  %461 = vmatprep.subr.mxu0 0.0
  %462 = vmatpush1.msra.mxu0 0.0
  %463 = vmatprep.subr.mxu0 0.0
  %464 = vmatpush1.msra.mxu0 0.0
  %465 = vmatprep.subr.mxu0 0.0
  %466 = vmatpush1.msra.mxu0 0.0
  %467 = vmatprep.subr.mxu0 0.0
  %468 = vmatpush1.msra.mxu0 0.0
  %469 = vmatprep.subr.mxu0 0.0
  %470 = vmatpush1.msra.mxu0 0.0
  %471 = vmatprep.subr.mxu0 0.0
  %472 = vmatpush1.msra.mxu0 0.0
  %473 = vmatprep.subr.mxu0 0.0
  %474 = vmatpush1.msra.mxu0 0.0
  %475 = vmatprep.subr.mxu0 0.0
  %476 = vmatpush1.msra.mxu0 0.0
  %477 = vmatprep.subr.mxu0 0.0
  %478 = vmatpush1.msra.mxu0 0.0
  %479 = vmatprep.subr.mxu0 0.0
  %480 = vmatpush1.msra.mxu0 0.0
  %481 = vmatprep.subr.mxu0 0.0
  %482 = vmatpush1.msra.mxu0 0.0
  %483 = vmatprep.subr.mxu0 0.0
  %484 = vmatpush1.msra.mxu0 0.0
  %485 = vmatprep.subr.mxu0 0.0
  %486 = vmatpush1.msra.mxu0 0.0
  %487 = vmatprep.subr.mxu0 0.0
  %488 = vmatpush1.msra.mxu0 %v457
  %489 = vmatprep.subr.mxu0 0.0
  %490 = vmatpush1.msra.mxu0 %v455
  %491 = vmatprep.subr.mxu0 0.0
  %492 = vmatpush1.msra.mxu0 %v453
  %493 = vmatprep.subr.mxu0 0.0
  %494 = vmatpush2.msra.mxu0 0.0
  %495 = vmatprep.subr.mxu0 0.0
  %496 = vmatpush2.msra.mxu0 0.0
  %497 = vmatprep.subr.mxu0 0.0
  %498 = vmatpush2.msra.mxu0 0.0
  %499 = vmatprep.subr.mxu0 0.0
  %500 = vmatpush2.msra.mxu0 0.0
  %501 = vmatprep.subr.mxu0 0.0
  %502 = vmatpush2.msra.mxu0 0.0
  %503 = vmatprep.subr.mxu0 0.0
  %504 = vmatpush2.msra.mxu0 0.0
  %505 = vmatprep.subr.mxu0 0.0
  %506 = vmatpush2.msra.mxu0 0.0
  %507 = vmatprep.subr.mxu0 0.0
  %508 = vmatpush2.msra.mxu0 0.0
  %509 = vmatprep.subr.mxu0 0.0
  %510 = vmatpush2.msra.mxu0 0.0
  %511 = vmatprep.subr.mxu0 0.0
  %512 = vmatpush2.msra.mxu0 0.0
  %513 = vmatprep.subr.mxu0 0.0
  %514 = vmatpush2.msra.mxu0 0.0
  %515 = vmatprep.subr.mxu0 0.0
  %516 = vmatpush2.msra.mxu0 0.0
  %517 = vmatprep.subr.mxu0 0.0
  %518 = vmatpush2.msra.mxu0 0.0
  %519 = vmatprep.subr.mxu0 0.0
  %520 = vmatpush2.msra.mxu0 0.0
  %521 = vmatprep.subr.mxu0 0.0
  %522 = vmatpush2.msra.mxu0 0.0
  %523 = vmatprep.subr.mxu0 0.0
  %524 = vmatpush2.msra.mxu0 0.0
  %525 = vmatprep.mubr.f32.mxu0 0.0
  %526 = vmatmul.mubr.f32.gmra.mxu0 %v153
  %v527 = vpop.f32.mrf.mxu0
  %v528 = vadd.f32 0.0, %v527
  %v529 = vpop.f32.mrf.mxu0
  %530 = vmatprep.mubr.f32.mxu0 0.0
  %531 = vmatmul.mubr.f32.gmra.mxu0 %v156
  %v532 = vpop.f32.mrf.mxu0
  %v533 = vadd.f32 0.0, %v532
  %v534 = vpop.f32.mrf.mxu0
  %535 = vmatprep.mubr.f32.mxu0 0.0
  %536 = vmatmul.mubr.f32.gmra.mxu0 %v159
  %v537 = vpop.f32.mrf.mxu0
  %v538 = vadd.f32 0.0, %v537
  %v539 = vpop.f32.mrf.mxu0
  %540 = vdwg.mxu0
  %v541 = vadd.f32 %v446, %v528
  %v542 = vadd.f32 %v447, %v533
  %v543 = vadd.f32 %v448, %v538
  %544 = vrot.lane.b32.xlu0 %v361, 126
  %v545 = vpop.permute.xlu0 %544
  %546 = vrot.lane.b32.xlu0 %v363, 126
  %v547 = vpop.permute.xlu0 %546
  %548 = vrot.lane.b32.xlu0 %v365, 126
  %v549 = vpop.permute.xlu0 %548
  %553 = vmatprep.subr.mxu0 0.0
  %554 = vmatpush1.msra.mxu0 0.0
  %555 = vmatprep.subr.mxu0 0.0
  %556 = vmatpush1.msra.mxu0 0.0
  %557 = vmatprep.subr.mxu0 0.0
  %558 = vmatpush1.msra.mxu0 0.0
  %559 = vmatprep.subr.mxu0 0.0
  %560 = vmatpush1.msra.mxu0 0.0
  %561 = vmatprep.subr.mxu0 0.0
  %562 = vmatpush1.msra.mxu0 0.0
  %563 = vmatprep.subr.mxu0 0.0
  %564 = vmatpush1.msra.mxu0 0.0
  %565 = vmatprep.subr.mxu0 0.0
  %566 = vmatpush1.msra.mxu0 0.0
  %567 = vmatprep.subr.mxu0 0.0
  %568 = vmatpush1.msra.mxu0 0.0
  %569 = vmatprep.subr.mxu0 0.0
  %570 = vmatpush1.msra.mxu0 0.0
  %571 = vmatprep.subr.mxu0 0.0
  %572 = vmatpush1.msra.mxu0 0.0
  %573 = vmatprep.subr.mxu0 0.0
  %574 = vmatpush1.msra.mxu0 0.0
  %575 = vmatprep.subr.mxu0 0.0
  %576 = vmatpush1.msra.mxu0 0.0
  %577 = vmatprep.subr.mxu0 0.0
  %578 = vmatpush1.msra.mxu0 0.0
  %579 = vmatprep.subr.mxu0 0.0
  %580 = vmatpush1.msra.mxu0 %v549
  %581 = vmatprep.subr.mxu0 0.0
  %582 = vmatpush1.msra.mxu0 %v547
  %583 = vmatprep.subr.mxu0 0.0
  %584 = vmatpush1.msra.mxu0 %v545
  %585 = vmatprep.subr.mxu0 0.0
  %586 = vmatpush2.msra.mxu0 0.0
  %587 = vmatprep.subr.mxu0 0.0
  %588 = vmatpush2.msra.mxu0 0.0
  %589 = vmatprep.subr.mxu0 0.0
  %590 = vmatpush2.msra.mxu0 0.0
  %591 = vmatprep.subr.mxu0 0.0
  %592 = vmatpush2.msra.mxu0 0.0
  %593 = vmatprep.subr.mxu0 0.0
  %594 = vmatpush2.msra.mxu0 0.0
  %595 = vmatprep.subr.mxu0 0.0
  %596 = vmatpush2.msra.mxu0 0.0
  %597 = vmatprep.subr.mxu0 0.0
  %598 = vmatpush2.msra.mxu0 0.0
  %599 = vmatprep.subr.mxu0 0.0
  %600 = vmatpush2.msra.mxu0 0.0
  %601 = vmatprep.subr.mxu0 0.0
  %602 = vmatpush2.msra.mxu0 0.0
  %603 = vmatprep.subr.mxu0 0.0
  %604 = vmatpush2.msra.mxu0 0.0
  %605 = vmatprep.subr.mxu0 0.0
  %606 = vmatpush2.msra.mxu0 0.0
  %607 = vmatprep.subr.mxu0 0.0
  %608 = vmatpush2.msra.mxu0 0.0
  %609 = vmatprep.subr.mxu0 0.0
  %610 = vmatpush2.msra.mxu0 0.0
  %611 = vmatprep.subr.mxu0 0.0
  %612 = vmatpush2.msra.mxu0 0.0
  %613 = vmatprep.subr.mxu0 0.0
  %614 = vmatpush2.msra.mxu0 0.0
  %615 = vmatprep.subr.mxu0 0.0
  %616 = vmatpush2.msra.mxu0 0.0
  %617 = vmatprep.mubr.f32.mxu0 0.0
  %618 = vmatmul.mubr.f32.gmra.mxu0 %v257
  %v619 = vpop.f32.mrf.mxu0
  %v620 = vadd.f32 0.0, %v619
  %v621 = vpop.f32.mrf.mxu0
  %622 = vmatprep.mubr.f32.mxu0 0.0
  %623 = vmatmul.mubr.f32.gmra.mxu0 %v260
  %v624 = vpop.f32.mrf.mxu0
  %v625 = vadd.f32 0.0, %v624
  %v626 = vpop.f32.mrf.mxu0
  %627 = vmatprep.mubr.f32.mxu0 0.0
  %628 = vmatmul.mubr.f32.gmra.mxu0 %v263
  %v629 = vpop.f32.mrf.mxu0
  %v630 = vadd.f32 0.0, %v629
  %v631 = vpop.f32.mrf.mxu0
  %632 = vdwg.mxu0
  %v633 = vadd.f32 %v541, %v620
  %v634 = vadd.f32 %v542, %v625
  %v635 = vadd.f32 %v543, %v630
  %v636 = vxor.u32 %v633, 2147483648
  %v637 = vxor.u32 %v634, 2147483648
  %v638 = vxor.u32 %v635, 2147483648
  %v639 = vmul.f32 %v636, 1.442695
  %v640 = vpow.pop %v639
  %v641 = vmul.f32 %v637, 1.442695
  %v642 = vpow.pop %v641
  %v643 = vmul.f32 %v638, 1.442695
  %v644 = vpow.pop %v643
  %v645 = vadd.f32 %v640, 1.0
  %v646 = vadd.f32 %v642, 1.0
  %v647 = vadd.f32 %v644, 1.0
  %v648 = vrcp.pop %v645
  %v649 = vmul.f32 1.0, %v648
  %v650 = vrcp.pop %v646
  %v651 = vmul.f32 1.0, %v650
  %v652 = vrcp.pop %v647
  %v653 = vmul.f32 1.0, %v652
  %654 = vmatprep.subr.mxu0 0.0
  %655 = vmatpush1.msra.mxu0 0.0
  %656 = vmatprep.subr.mxu0 0.0
  %657 = vmatpush1.msra.mxu0 0.0
  %658 = vmatprep.subr.mxu0 0.0
  %659 = vmatpush1.msra.mxu0 0.0
  %660 = vmatprep.subr.mxu0 0.0
  %661 = vmatpush1.msra.mxu0 0.0
  %662 = vmatprep.subr.mxu0 0.0
  %663 = vmatpush1.msra.mxu0 0.0
  %664 = vmatprep.subr.mxu0 0.0
  %665 = vmatpush1.msra.mxu0 0.0
  %666 = vmatprep.subr.mxu0 0.0
  %667 = vmatpush1.msra.mxu0 0.0
  %668 = vmatprep.subr.mxu0 0.0
  %669 = vmatpush1.msra.mxu0 0.0
  %670 = vmatprep.subr.mxu0 0.0
  %671 = vmatpush1.msra.mxu0 0.0
  %672 = vmatprep.subr.mxu0 0.0
  %673 = vmatpush1.msra.mxu0 0.0
  %674 = vmatprep.subr.mxu0 0.0
  %675 = vmatpush1.msra.mxu0 0.0
  %676 = vmatprep.subr.mxu0 0.0
  %677 = vmatpush1.msra.mxu0 0.0
  %678 = vmatprep.subr.mxu0 0.0
  %679 = vmatpush1.msra.mxu0 0.0
  %680 = vmatprep.subr.mxu0 0.0
  %681 = vmatpush1.msra.mxu0 %v653
  %682 = vmatprep.subr.mxu0 0.0
  %683 = vmatpush1.msra.mxu0 %v651
  %684 = vmatprep.subr.mxu0 0.0
  %685 = vmatpush1.msra.mxu0 %v649
  %686 = vmatprep.subr.mxu0 0.0
  %687 = vmatpush2.msra.mxu0 0.0
  %688 = vmatprep.subr.mxu0 0.0
  %689 = vmatpush2.msra.mxu0 0.0
  %690 = vmatprep.subr.mxu0 0.0
  %691 = vmatpush2.msra.mxu0 0.0
  %692 = vmatprep.subr.mxu0 0.0
  %693 = vmatpush2.msra.mxu0 0.0
  %694 = vmatprep.subr.mxu0 0.0
  %695 = vmatpush2.msra.mxu0 0.0
  %696 = vmatprep.subr.mxu0 0.0
  %697 = vmatpush2.msra.mxu0 0.0
  %698 = vmatprep.subr.mxu0 0.0
  %699 = vmatpush2.msra.mxu0 0.0
  %700 = vmatprep.subr.mxu0 0.0
  %701 = vmatpush2.msra.mxu0 0.0
  %702 = vmatprep.subr.mxu0 0.0
  %703 = vmatpush2.msra.mxu0 0.0
  %704 = vmatprep.subr.mxu0 0.0
  %705 = vmatpush2.msra.mxu0 0.0
  %706 = vmatprep.subr.mxu0 0.0
  %707 = vmatpush2.msra.mxu0 0.0
  %708 = vmatprep.subr.mxu0 0.0
  %709 = vmatpush2.msra.mxu0 0.0
  %710 = vmatprep.subr.mxu0 0.0
  %711 = vmatpush2.msra.mxu0 0.0
  %712 = vmatprep.subr.mxu0 0.0
  %713 = vmatpush2.msra.mxu0 0.0
  %714 = vmatprep.subr.mxu0 0.0
  %715 = vmatpush2.msra.mxu0 0.0
  %716 = vmatprep.subr.mxu0 0.0
  %717 = vmatpush2.msra.mxu0 0.0
  %718 = vmatprep.mubr.f32.mxu0 0.0
  %719 = vmatmul.mubr.f32.gmra.mxu0 %v31
  %v720 = vpop.f32.mrf.mxu0
  %v721 = vadd.f32 0.0, %v720
  %v722 = vpop.f32.mrf.mxu0
  %723 = vmatprep.mubr.f32.mxu0 0.0
  %724 = vmatmul.mubr.f32.gmra.mxu0 %v34
  %v725 = vpop.f32.mrf.mxu0
  %v726 = vadd.f32 0.0, %v725
  %v727 = vpop.f32.mrf.mxu0
  %728 = vmatprep.mubr.f32.mxu0 0.0
  %729 = vmatmul.mubr.f32.gmra.mxu0 %v37
  %v730 = vpop.f32.mrf.mxu0
  %v731 = vadd.f32 0.0, %v730
  %v732 = vpop.f32.mrf.mxu0
  %733 = vdwg.mxu0
  %v734 = vadd.f32 %v122, %v721
  %v735 = vadd.f32 %v127, %v726
  %v736 = vadd.f32 %v132, %v731
  %740 = vrot.lane.b32.xlu0 %v649, 127
  %v741 = vpop.permute.xlu0 %740
  %742 = vrot.lane.b32.xlu0 %v651, 127
  %v743 = vpop.permute.xlu0 %742
  %744 = vrot.lane.b32.xlu0 %v653, 127
  %v745 = vpop.permute.xlu0 %744
  %749 = vmatprep.subr.mxu0 0.0
  %750 = vmatpush1.msra.mxu0 0.0
  %751 = vmatprep.subr.mxu0 0.0
  %752 = vmatpush1.msra.mxu0 0.0
  %753 = vmatprep.subr.mxu0 0.0
  %754 = vmatpush1.msra.mxu0 0.0
  %755 = vmatprep.subr.mxu0 0.0
  %756 = vmatpush1.msra.mxu0 0.0
  %757 = vmatprep.subr.mxu0 0.0
  %758 = vmatpush1.msra.mxu0 0.0
  %759 = vmatprep.subr.mxu0 0.0
  %760 = vmatpush1.msra.mxu0 0.0
  %761 = vmatprep.subr.mxu0 0.0
  %762 = vmatpush1.msra.mxu0 0.0
  %763 = vmatprep.subr.mxu0 0.0
  %764 = vmatpush1.msra.mxu0 0.0
  %765 = vmatprep.subr.mxu0 0.0
  %766 = vmatpush1.msra.mxu0 0.0
  %767 = vmatprep.subr.mxu0 0.0
  %768 = vmatpush1.msra.mxu0 0.0
  %769 = vmatprep.subr.mxu0 0.0
  %770 = vmatpush1.msra.mxu0 0.0
  %771 = vmatprep.subr.mxu0 0.0
  %772 = vmatpush1.msra.mxu0 0.0
  %773 = vmatprep.subr.mxu0 0.0
  %774 = vmatpush1.msra.mxu0 0.0
  %775 = vmatprep.subr.mxu0 0.0
  %776 = vmatpush1.msra.mxu0 %v745
  %777 = vmatprep.subr.mxu0 0.0
  %778 = vmatpush1.msra.mxu0 %v743
  %779 = vmatprep.subr.mxu0 0.0
  %780 = vmatpush1.msra.mxu0 %v741
  %781 = vmatprep.subr.mxu0 0.0
  %782 = vmatpush2.msra.mxu0 0.0
  %783 = vmatprep.subr.mxu0 0.0
  %784 = vmatpush2.msra.mxu0 0.0
  %785 = vmatprep.subr.mxu0 0.0
  %786 = vmatpush2.msra.mxu0 0.0
  %787 = vmatprep.subr.mxu0 0.0
  %788 = vmatpush2.msra.mxu0 0.0
  %789 = vmatprep.subr.mxu0 0.0
  %790 = vmatpush2.msra.mxu0 0.0
  %791 = vmatprep.subr.mxu0 0.0
  %792 = vmatpush2.msra.mxu0 0.0
  %793 = vmatprep.subr.mxu0 0.0
  %794 = vmatpush2.msra.mxu0 0.0
  %795 = vmatprep.subr.mxu0 0.0
  %796 = vmatpush2.msra.mxu0 0.0
  %797 = vmatprep.subr.mxu0 0.0
  %798 = vmatpush2.msra.mxu0 0.0
  %799 = vmatprep.subr.mxu0 0.0
  %800 = vmatpush2.msra.mxu0 0.0
  %801 = vmatprep.subr.mxu0 0.0
  %802 = vmatpush2.msra.mxu0 0.0
  %803 = vmatprep.subr.mxu0 0.0
  %804 = vmatpush2.msra.mxu0 0.0
  %805 = vmatprep.subr.mxu0 0.0
  %806 = vmatpush2.msra.mxu0 0.0
  %807 = vmatprep.subr.mxu0 0.0
  %808 = vmatpush2.msra.mxu0 0.0
  %809 = vmatprep.subr.mxu0 0.0
  %810 = vmatpush2.msra.mxu0 0.0
  %811 = vmatprep.subr.mxu0 0.0
  %812 = vmatpush2.msra.mxu0 0.0
  %813 = vmatprep.mubr.f32.mxu0 0.0
  %814 = vmatmul.mubr.f32.gmra.mxu0 %v153
  %v815 = vpop.f32.mrf.mxu0
  %v816 = vadd.f32 0.0, %v815
  %v817 = vpop.f32.mrf.mxu0
  %818 = vmatprep.mubr.f32.mxu0 0.0
  %819 = vmatmul.mubr.f32.gmra.mxu0 %v156
  %v820 = vpop.f32.mrf.mxu0
  %v821 = vadd.f32 0.0, %v820
  %v822 = vpop.f32.mrf.mxu0
  %823 = vmatprep.mubr.f32.mxu0 0.0
  %824 = vmatmul.mubr.f32.gmra.mxu0 %v159
  %v825 = vpop.f32.mrf.mxu0
  %v826 = vadd.f32 0.0, %v825
  %v827 = vpop.f32.mrf.mxu0
  %828 = vdwg.mxu0
  %v829 = vadd.f32 %v734, %v816
  %v830 = vadd.f32 %v735, %v821
  %v831 = vadd.f32 %v736, %v826
  %832 = vrot.lane.b32.xlu0 %v649, 126
  %v833 = vpop.permute.xlu0 %832
  %834 = vrot.lane.b32.xlu0 %v651, 126
  %v835 = vpop.permute.xlu0 %834
  %836 = vrot.lane.b32.xlu0 %v653, 126
  %v837 = vpop.permute.xlu0 %836
  %841 = vmatprep.subr.mxu0 0.0
  %842 = vmatpush1.msra.mxu0 0.0
  %843 = vmatprep.subr.mxu0 0.0
  %844 = vmatpush1.msra.mxu0 0.0
  %845 = vmatprep.subr.mxu0 0.0
  %846 = vmatpush1.msra.mxu0 0.0
  %847 = vmatprep.subr.mxu0 0.0
  %848 = vmatpush1.msra.mxu0 0.0
  %849 = vmatprep.subr.mxu0 0.0
  %850 = vmatpush1.msra.mxu0 0.0
  %851 = vmatprep.subr.mxu0 0.0
  %852 = vmatpush1.msra.mxu0 0.0
  %853 = vmatprep.subr.mxu0 0.0
  %854 = vmatpush1.msra.mxu0 0.0
  %855 = vmatprep.subr.mxu0 0.0
  %856 = vmatpush1.msra.mxu0 0.0
  %857 = vmatprep.subr.mxu0 0.0
  %858 = vmatpush1.msra.mxu0 0.0
  %859 = vmatprep.subr.mxu0 0.0
  %860 = vmatpush1.msra.mxu0 0.0
  %861 = vmatprep.subr.mxu0 0.0
  %862 = vmatpush1.msra.mxu0 0.0
  %863 = vmatprep.subr.mxu0 0.0
  %864 = vmatpush1.msra.mxu0 0.0
  %865 = vmatprep.subr.mxu0 0.0
  %866 = vmatpush1.msra.mxu0 0.0
  %867 = vmatprep.subr.mxu0 0.0
  %868 = vmatpush1.msra.mxu0 %v837
  %869 = vmatprep.subr.mxu0 0.0
  %870 = vmatpush1.msra.mxu0 %v835
  %871 = vmatprep.subr.mxu0 0.0
  %872 = vmatpush1.msra.mxu0 %v833
  %873 = vmatprep.subr.mxu0 0.0
  %874 = vmatpush2.msra.mxu0 0.0
  %875 = vmatprep.subr.mxu0 0.0
  %876 = vmatpush2.msra.mxu0 0.0
  %877 = vmatprep.subr.mxu0 0.0
  %878 = vmatpush2.msra.mxu0 0.0
  %879 = vmatprep.subr.mxu0 0.0
  %880 = vmatpush2.msra.mxu0 0.0
  %881 = vmatprep.subr.mxu0 0.0
  %882 = vmatpush2.msra.mxu0 0.0
  %883 = vmatprep.subr.mxu0 0.0
  %884 = vmatpush2.msra.mxu0 0.0
  %885 = vmatprep.subr.mxu0 0.0
  %886 = vmatpush2.msra.mxu0 0.0
  %887 = vmatprep.subr.mxu0 0.0
  %888 = vmatpush2.msra.mxu0 0.0
  %889 = vmatprep.subr.mxu0 0.0
  %890 = vmatpush2.msra.mxu0 0.0
  %891 = vmatprep.subr.mxu0 0.0
  %892 = vmatpush2.msra.mxu0 0.0
  %893 = vmatprep.subr.mxu0 0.0
  %894 = vmatpush2.msra.mxu0 0.0
  %895 = vmatprep.subr.mxu0 0.0
  %896 = vmatpush2.msra.mxu0 0.0
  %897 = vmatprep.subr.mxu0 0.0
  %898 = vmatpush2.msra.mxu0 0.0
  %899 = vmatprep.subr.mxu0 0.0
  %900 = vmatpush2.msra.mxu0 0.0
  %901 = vmatprep.subr.mxu0 0.0
  %902 = vmatpush2.msra.mxu0 0.0
  %903 = vmatprep.subr.mxu0 0.0
  %904 = vmatpush2.msra.mxu0 0.0
  %905 = vmatprep.mubr.f32.mxu0 0.0
  %906 = vmatmul.mubr.f32.gmra.mxu0 %v257
  %v907 = vpop.f32.mrf.mxu0
  %v908 = vadd.f32 0.0, %v907
  %v909 = vpop.f32.mrf.mxu0
  %910 = vmatprep.mubr.f32.mxu0 0.0
  %911 = vmatmul.mubr.f32.gmra.mxu0 %v260
  %v912 = vpop.f32.mrf.mxu0
  %v913 = vadd.f32 0.0, %v912
  %v914 = vpop.f32.mrf.mxu0
  %915 = vmatprep.mubr.f32.mxu0 0.0
  %916 = vmatmul.mubr.f32.gmra.mxu0 %v263
  %v917 = vpop.f32.mrf.mxu0
  %v918 = vadd.f32 0.0, %v917
  %v919 = vpop.f32.mrf.mxu0
  %920 = vdwg.mxu0
  %v921 = vadd.f32 %v829, %v908
  %v922 = vadd.f32 %v830, %v913
  %v923 = vadd.f32 %v831, %v918
  %v924 = vxor.u32 %v921, 2147483648
  %v925 = vxor.u32 %v922, 2147483648
  %v926 = vxor.u32 %v923, 2147483648
  %v927 = vmul.f32 %v924, 1.442695
  %v928 = vpow.pop %v927
  %v929 = vmul.f32 %v925, 1.442695
  %v930 = vpow.pop %v929
  %v931 = vmul.f32 %v926, 1.442695
  %v932 = vpow.pop %v931
  %v933 = vadd.f32 %v928, 1.0
  %v934 = vadd.f32 %v930, 1.0
  %v935 = vadd.f32 %v932, 1.0
  %v936 = vrcp.pop %v933
  %v937 = vmul.f32 1.0, %v936
  %v938 = vrcp.pop %v934
  %v939 = vmul.f32 1.0, %v938
  %v940 = vrcp.pop %v935
  %v941 = vmul.f32 1.0, %v940
  %vm942 = vcmask 539648
  %943 = vst.msk [vmem:[#allocation2] sm:$0xff] %vm942, %v937
  %944 = vst.msk [vmem:[#allocation2 + $0x8] sm:$0xff] %vm942, %v939
  %945 = vst.msk [vmem:[#allocation2 + $0x10] sm:$0xff] %vm942, %v941
  %v946 = vld [vmem:[#allocation2] sm:$0x1]
  %vm947 = vcmask 188416
  %948 = vst.msk [vmem:[#allocation3] sm:$0x1] %vm947, %v946
  %v949 = vld [vmem:[#allocation2] sm:$0x1]
  %951 = vrot.lane.b32.xlu0 %v949, 104
  %v952 = vpop.permute.xlu0 %951
  %954 = vst.msk [vmem:[#allocation3 + $0x1] sm:$0x1] %vm947, %v952
  %v955 = vld [vmem:[#allocation2] sm:$0x1]
  %957 = vrot.lane.b32.xlu0 %v955, 80
  %v958 = vpop.permute.xlu0 %957
  %vm960 = vcmask 139264
  %961 = vst.msk [vmem:[#allocation3 + $0x2] sm:$0x1] %vm960, %v958
  %v962 = vld [vmem:[#allocation2 + $0x1] sm:$0x1]
  %964 = vrot.lane.b32.xlu0 %v962, 18
  %v965 = vpop.permute.xlu0 %964
  %vm967 = vcmask 188560
  %968 = vst.msk [vmem:[#allocation3 + $0x2] sm:$0x1] %vm967, %v965
  %v969 = vld [vmem:[#allocation2 + $0x1] sm:$0x1]
  %971 = vrot.lane.b32.xlu0 %v969, 122
  %v972 = vpop.permute.xlu0 %971
  %974 = vst.msk [vmem:[#allocation3 + $0x3] sm:$0x1] %vm947, %v972
  %v975 = vld [vmem:[#allocation2 + $0x1] sm:$0x1]
  %977 = vrot.lane.b32.xlu0 %v975, 98
  %v978 = vpop.permute.xlu0 %977
  %980 = vst.msk [vmem:[#allocation3 + $0x4] sm:$0x1] %vm947, %v978
  %v981 = vld [vmem:[#allocation2 + $0x1] sm:$0x1]
  %983 = vrot.lane.b32.xlu0 %v981, 74
  %v984 = vpop.permute.xlu0 %983
  %vm986 = vcmask 90112
  %987 = vst.msk [vmem:[#allocation3 + $0x5] sm:$0x1] %vm986, %v984
  %v988 = vld [vmem:[#allocation2 + $0x2] sm:$0x1]
  %990 = vrot.lane.b32.xlu0 %v988, 12
  %v991 = vpop.permute.xlu0 %990
  %vm993 = vcmask 188512
  %994 = vst.msk [vmem:[#allocation3 + $0x5] sm:$0x1] %vm993, %v991
  %v995 = vld [vmem:[#allocation2 + $0x2] sm:$0x1]
  %997 = vrot.lane.b32.xlu0 %v995, 116
  %v998 = vpop.permute.xlu0 %997
  %1000 = vst.msk [vmem:[#allocation3 + $0x6] sm:$0x1] %vm947, %v998
  %v1001 = vld [vmem:[#allocation2 + $0x2] sm:$0x1]
  %1003 = vrot.lane.b32.xlu0 %v1001, 92
  %v1004 = vpop.permute.xlu0 %1003
  %1006 = vst.msk [vmem:[#allocation3 + $0x7] sm:$0x1] %vm947, %v1004
  %v1007 = vld [vmem:[#allocation2 + $0x2] sm:$0x1]
  %1009 = vrot.lane.b32.xlu0 %v1007, 68
  %v1010 = vpop.permute.xlu0 %1009
  %vm1012 = vcmask 40960
  %1013 = vst.msk [vmem:[#allocation3 + $0x8] sm:$0x1] %vm1012, %v1010
  %v1014 = vld [vmem:[#allocation2 + $0x3] sm:$0x1]
  %1016 = vrot.lane.b32.xlu0 %v1014, 6
  %v1017 = vpop.permute.xlu0 %1016
  %vm1019 = vcmask 188464
  %1020 = vst.msk [vmem:[#allocation3 + $0x8] sm:$0x1] %vm1019, %v1017
  %v1021 = vld [vmem:[#allocation2 + $0x3] sm:$0x1]
  %1023 = vrot.lane.b32.xlu0 %v1021, 110
  %v1024 = vpop.permute.xlu0 %1023
  %1026 = vst.msk [vmem:[#allocation3 + $0x9] sm:$0x1] %vm947, %v1024
  %v1027 = vld [vmem:[#allocation2 + $0x3] sm:$0x1]
  %1029 = vrot.lane.b32.xlu0 %v1027, 86
  %v1030 = vpop.permute.xlu0 %1029
  %1032 = vst.msk [vmem:[#allocation3 + $0xa] sm:$0x1] %vm947, %v1030
  %v1033 = vld [vmem:[#allocation2 + $0x4] sm:$0x1]
  %1034 = vst.msk [vmem:[#allocation3 + $0xb] sm:$0x1] %vm947, %v1033
  %v1035 = vld [vmem:[#allocation2 + $0x4] sm:$0x1]
  %1037 = vrot.lane.b32.xlu0 %v1035, 104
  %v1038 = vpop.permute.xlu0 %1037
  %1040 = vst.msk [vmem:[#allocation3 + $0xc] sm:$0x1] %vm947, %v1038
  %v1041 = vld [vmem:[#allocation2 + $0x4] sm:$0x1]
  %1043 = vrot.lane.b32.xlu0 %v1041, 80
  %v1044 = vpop.permute.xlu0 %1043
  %1046 = vst.msk [vmem:[#allocation3 + $0xd] sm:$0x1] %vm960, %v1044
  %v1047 = vld [vmem:[#allocation2 + $0x5] sm:$0x1]
  %1049 = vrot.lane.b32.xlu0 %v1047, 18
  %v1050 = vpop.permute.xlu0 %1049
  %1052 = vst.msk [vmem:[#allocation3 + $0xd] sm:$0x1] %vm967, %v1050
  %v1053 = vld [vmem:[#allocation2 + $0x5] sm:$0x1]
  %1055 = vrot.lane.b32.xlu0 %v1053, 122
  %v1056 = vpop.permute.xlu0 %1055
  %1058 = vst.msk [vmem:[#allocation3 + $0xe] sm:$0x1] %vm947, %v1056
  %v1059 = vld [vmem:[#allocation2 + $0x5] sm:$0x1]
  %1061 = vrot.lane.b32.xlu0 %v1059, 98
  %v1062 = vpop.permute.xlu0 %1061
  %1064 = vst.msk [vmem:[#allocation3 + $0xf] sm:$0x1] %vm947, %v1062
  %v1065 = vld [vmem:[#allocation2 + $0x5] sm:$0x1]
  %1067 = vrot.lane.b32.xlu0 %v1065, 74
  %v1068 = vpop.permute.xlu0 %1067
  %1070 = vst.msk [vmem:[#allocation3 + $0x10] sm:$0x1] %vm986, %v1068
  %v1071 = vld [vmem:[#allocation2 + $0x6] sm:$0x1]
  %1073 = vrot.lane.b32.xlu0 %v1071, 12
  %v1074 = vpop.permute.xlu0 %1073
  %1076 = vst.msk [vmem:[#allocation3 + $0x10] sm:$0x1] %vm993, %v1074
  %v1077 = vld [vmem:[#allocation2 + $0x6] sm:$0x1]
  %1079 = vrot.lane.b32.xlu0 %v1077, 116
  %v1080 = vpop.permute.xlu0 %1079
  %1082 = vst.msk [vmem:[#allocation3 + $0x11] sm:$0x1] %vm947, %v1080
  %v1083 = vld [vmem:[#allocation2 + $0x6] sm:$0x1]
  %1085 = vrot.lane.b32.xlu0 %v1083, 92
  %v1086 = vpop.permute.xlu0 %1085
  %1088 = vst.msk [vmem:[#allocation3 + $0x12] sm:$0x1] %vm947, %v1086
  %v1089 = vld [vmem:[#allocation2 + $0x6] sm:$0x1]
  %1091 = vrot.lane.b32.xlu0 %v1089, 68
  %v1092 = vpop.permute.xlu0 %1091
  %1094 = vst.msk [vmem:[#allocation3 + $0x13] sm:$0x1] %vm1012, %v1092
  %v1095 = vld [vmem:[#allocation2 + $0x7] sm:$0x1]
  %1097 = vrot.lane.b32.xlu0 %v1095, 6
  %v1098 = vpop.permute.xlu0 %1097
  %1100 = vst.msk [vmem:[#allocation3 + $0x13] sm:$0x1] %vm1019, %v1098
  %v1101 = vld [vmem:[#allocation2 + $0x7] sm:$0x1]
  %1103 = vrot.lane.b32.xlu0 %v1101, 110
  %v1104 = vpop.permute.xlu0 %1103
  %1106 = vst.msk [vmem:[#allocation3 + $0x14] sm:$0x1] %vm947, %v1104
  %v1107 = vld [vmem:[#allocation2 + $0x7] sm:$0x1]
  %1109 = vrot.lane.b32.xlu0 %v1107, 86
  %v1110 = vpop.permute.xlu0 %1109
  %1112 = vst.msk [vmem:[#allocation3 + $0x15] sm:$0x1] %vm947, %v1110
  %v1113 = vld [vmem:[#allocation2 + $0x8] sm:$0x1]
  %1114 = vst.msk [vmem:[#allocation3 + $0x16] sm:$0x1] %vm947, %v1113
  %v1115 = vld [vmem:[#allocation2 + $0x8] sm:$0x1]
  %1117 = vrot.lane.b32.xlu0 %v1115, 104
  %v1118 = vpop.permute.xlu0 %1117
  %1120 = vst.msk [vmem:[#allocation3 + $0x17] sm:$0x1] %vm947, %v1118
  %v1121 = vld [vmem:[#allocation2 + $0x8] sm:$0x1]
  %1123 = vrot.lane.b32.xlu0 %v1121, 80
  %v1124 = vpop.permute.xlu0 %1123
  %1126 = vst.msk [vmem:[#allocation3 + $0x18] sm:$0x1] %vm960, %v1124
  %v1127 = vld [vmem:[#allocation2 + $0x9] sm:$0x1]
  %1129 = vrot.lane.b32.xlu0 %v1127, 18
  %v1130 = vpop.permute.xlu0 %1129
  %1132 = vst.msk [vmem:[#allocation3 + $0x18] sm:$0x1] %vm967, %v1130
  %v1133 = vld [vmem:[#allocation2 + $0x9] sm:$0x1]
  %1135 = vrot.lane.b32.xlu0 %v1133, 122
  %v1136 = vpop.permute.xlu0 %1135
  %1138 = vst.msk [vmem:[#allocation3 + $0x19] sm:$0x1] %vm947, %v1136
  %v1139 = vld [vmem:[#allocation2 + $0x9] sm:$0x1]
  %1141 = vrot.lane.b32.xlu0 %v1139, 98
  %v1142 = vpop.permute.xlu0 %1141
  %1144 = vst.msk [vmem:[#allocation3 + $0x1a] sm:$0x1] %vm947, %v1142
  %v1145 = vld [vmem:[#allocation2 + $0x9] sm:$0x1]
  %1147 = vrot.lane.b32.xlu0 %v1145, 74
  %v1148 = vpop.permute.xlu0 %1147
  %1150 = vst.msk [vmem:[#allocation3 + $0x1b] sm:$0x1] %vm986, %v1148
  %v1151 = vld [vmem:[#allocation2 + $0xa] sm:$0x1]
  %1153 = vrot.lane.b32.xlu0 %v1151, 12
  %v1154 = vpop.permute.xlu0 %1153
  %1156 = vst.msk [vmem:[#allocation3 + $0x1b] sm:$0x1] %vm993, %v1154
  %v1157 = vld [vmem:[#allocation2 + $0xa] sm:$0x1]
  %1159 = vrot.lane.b32.xlu0 %v1157, 116
  %v1160 = vpop.permute.xlu0 %1159
  %1162 = vst.msk [vmem:[#allocation3 + $0x1c] sm:$0x1] %vm947, %v1160
  %v1163 = vld [vmem:[#allocation2 + $0xa] sm:$0x1]
  %1165 = vrot.lane.b32.xlu0 %v1163, 92
  %v1166 = vpop.permute.xlu0 %1165
  %1168 = vst.msk [vmem:[#allocation3 + $0x1d] sm:$0x1] %vm947, %v1166
  %v1169 = vld [vmem:[#allocation2 + $0xa] sm:$0x1]
  %1171 = vrot.lane.b32.xlu0 %v1169, 68
  %v1172 = vpop.permute.xlu0 %1171
  %1174 = vst.msk [vmem:[#allocation3 + $0x1e] sm:$0x1] %vm1012, %v1172
  %v1175 = vld [vmem:[#allocation2 + $0xb] sm:$0x1]
  %1177 = vrot.lane.b32.xlu0 %v1175, 6
  %v1178 = vpop.permute.xlu0 %1177
  %1180 = vst.msk [vmem:[#allocation3 + $0x1e] sm:$0x1] %vm1019, %v1178
  %v1181 = vld [vmem:[#allocation2 + $0xb] sm:$0x1]
  %1183 = vrot.lane.b32.xlu0 %v1181, 110
  %v1184 = vpop.permute.xlu0 %1183
  %1186 = vst.msk [vmem:[#allocation3 + $0x1f] sm:$0x1] %vm947, %v1184
  %v1187 = vld [vmem:[#allocation2 + $0xb] sm:$0x1]
  %1189 = vrot.lane.b32.xlu0 %v1187, 86
  %v1190 = vpop.permute.xlu0 %1189
  %1192 = vst.msk [vmem:[#allocation3 + $0x20] sm:$0x1] %vm947, %v1190
  %v1193 = vld [vmem:[#allocation2 + $0xc] sm:$0x1]
  %1194 = vst.msk [vmem:[#allocation3 + $0x21] sm:$0x1] %vm947, %v1193
  %v1195 = vld [vmem:[#allocation2 + $0xc] sm:$0x1]
  %1197 = vrot.lane.b32.xlu0 %v1195, 104
  %v1198 = vpop.permute.xlu0 %1197
  %1200 = vst.msk [vmem:[#allocation3 + $0x22] sm:$0x1] %vm947, %v1198
  %v1201 = vld [vmem:[#allocation2 + $0xc] sm:$0x1]
  %1203 = vrot.lane.b32.xlu0 %v1201, 80
  %v1204 = vpop.permute.xlu0 %1203
  %1206 = vst.msk [vmem:[#allocation3 + $0x23] sm:$0x1] %vm960, %v1204
  %v1207 = vld [vmem:[#allocation2 + $0xd] sm:$0x1]
  %1209 = vrot.lane.b32.xlu0 %v1207, 18
  %v1210 = vpop.permute.xlu0 %1209
  %1212 = vst.msk [vmem:[#allocation3 + $0x23] sm:$0x1] %vm967, %v1210
  %v1213 = vld [vmem:[#allocation2 + $0xd] sm:$0x1]
  %1215 = vrot.lane.b32.xlu0 %v1213, 122
  %v1216 = vpop.permute.xlu0 %1215
  %1218 = vst.msk [vmem:[#allocation3 + $0x24] sm:$0x1] %vm947, %v1216
  %v1219 = vld [vmem:[#allocation2 + $0xd] sm:$0x1]
  %1221 = vrot.lane.b32.xlu0 %v1219, 98
  %v1222 = vpop.permute.xlu0 %1221
  %1224 = vst.msk [vmem:[#allocation3 + $0x25] sm:$0x1] %vm947, %v1222
  %v1225 = vld [vmem:[#allocation2 + $0xd] sm:$0x1]
  %1227 = vrot.lane.b32.xlu0 %v1225, 74
  %v1228 = vpop.permute.xlu0 %1227
  %1230 = vst.msk [vmem:[#allocation3 + $0x26] sm:$0x1] %vm986, %v1228
  %v1231 = vld [vmem:[#allocation2 + $0xe] sm:$0x1]
  %1233 = vrot.lane.b32.xlu0 %v1231, 12
  %v1234 = vpop.permute.xlu0 %1233
  %1236 = vst.msk [vmem:[#allocation3 + $0x26] sm:$0x1] %vm993, %v1234
  %v1237 = vld [vmem:[#allocation2 + $0xe] sm:$0x1]
  %1239 = vrot.lane.b32.xlu0 %v1237, 116
  %v1240 = vpop.permute.xlu0 %1239
  %1242 = vst.msk [vmem:[#allocation3 + $0x27] sm:$0x1] %vm947, %v1240
  %v1243 = vld [vmem:[#allocation2 + $0xe] sm:$0x1]
  %1245 = vrot.lane.b32.xlu0 %v1243, 92
  %v1246 = vpop.permute.xlu0 %1245
  %1248 = vst.msk [vmem:[#allocation3 + $0x28] sm:$0x1] %vm947, %v1246
  %v1249 = vld [vmem:[#allocation2 + $0xe] sm:$0x1]
  %1251 = vrot.lane.b32.xlu0 %v1249, 68
  %v1252 = vpop.permute.xlu0 %1251
  %1254 = vst.msk [vmem:[#allocation3 + $0x29] sm:$0x1] %vm1012, %v1252
  %v1255 = vld [vmem:[#allocation2 + $0xf] sm:$0x1]
  %1257 = vrot.lane.b32.xlu0 %v1255, 6
  %v1258 = vpop.permute.xlu0 %1257
  %1260 = vst.msk [vmem:[#allocation3 + $0x29] sm:$0x1] %vm1019, %v1258
  %v1261 = vld [vmem:[#allocation2 + $0xf] sm:$0x1]
  %1263 = vrot.lane.b32.xlu0 %v1261, 110
  %v1264 = vpop.permute.xlu0 %1263
  %1266 = vst.msk [vmem:[#allocation3 + $0x2a] sm:$0x1] %vm947, %v1264
  %v1267 = vld [vmem:[#allocation2 + $0xf] sm:$0x1]
  %1269 = vrot.lane.b32.xlu0 %v1267, 86
  %v1270 = vpop.permute.xlu0 %1269
  %1272 = vst.msk [vmem:[#allocation3 + $0x2b] sm:$0x1] %vm947, %v1270
  %v1273 = vld [vmem:[#allocation2 + $0x10] sm:$0x1]
  %1274 = vst.msk [vmem:[#allocation3 + $0x2c] sm:$0x1] %vm947, %v1273
  %v1275 = vld [vmem:[#allocation2 + $0x10] sm:$0x1]
  %1277 = vrot.lane.b32.xlu0 %v1275, 104
  %v1278 = vpop.permute.xlu0 %1277
  %1280 = vst.msk [vmem:[#allocation3 + $0x2d] sm:$0x1] %vm947, %v1278
  %v1281 = vld [vmem:[#allocation2 + $0x10] sm:$0x1]
  %1283 = vrot.lane.b32.xlu0 %v1281, 80
  %v1284 = vpop.permute.xlu0 %1283
  %1286 = vst.msk [vmem:[#allocation3 + $0x2e] sm:$0x1] %vm960, %v1284
  %v1287 = vld [vmem:[#allocation2 + $0x11] sm:$0x1]
  %1289 = vrot.lane.b32.xlu0 %v1287, 18
  %v1290 = vpop.permute.xlu0 %1289
  %1292 = vst.msk [vmem:[#allocation3 + $0x2e] sm:$0x1] %vm967, %v1290
  %v1293 = vld [vmem:[#allocation2 + $0x11] sm:$0x1]
  %1295 = vrot.lane.b32.xlu0 %v1293, 122
  %v1296 = vpop.permute.xlu0 %1295
  %1298 = vst.msk [vmem:[#allocation3 + $0x2f] sm:$0x1] %vm947, %v1296
  %v1299 = vld [vmem:[#allocation2 + $0x11] sm:$0x1]
  %1301 = vrot.lane.b32.xlu0 %v1299, 98
  %v1302 = vpop.permute.xlu0 %1301
  %1304 = vst.msk [vmem:[#allocation3 + $0x30] sm:$0x1] %vm947, %v1302
  %v1305 = vld [vmem:[#allocation2 + $0x11] sm:$0x1]
  %1307 = vrot.lane.b32.xlu0 %v1305, 74
  %v1308 = vpop.permute.xlu0 %1307
  %1310 = vst.msk [vmem:[#allocation3 + $0x31] sm:$0x1] %vm986, %v1308
  %v1311 = vld [vmem:[#allocation2 + $0x12] sm:$0x1]
  %1313 = vrot.lane.b32.xlu0 %v1311, 12
  %v1314 = vpop.permute.xlu0 %1313
  %1316 = vst.msk [vmem:[#allocation3 + $0x31] sm:$0x1] %vm993, %v1314
  %v1317 = vld [vmem:[#allocation2 + $0x12] sm:$0x1]
  %1319 = vrot.lane.b32.xlu0 %v1317, 116
  %v1320 = vpop.permute.xlu0 %1319
  %1322 = vst.msk [vmem:[#allocation3 + $0x32] sm:$0x1] %vm947, %v1320
  %v1323 = vld [vmem:[#allocation2 + $0x12] sm:$0x1]
  %1325 = vrot.lane.b32.xlu0 %v1323, 92
  %v1326 = vpop.permute.xlu0 %1325
  %1328 = vst.msk [vmem:[#allocation3 + $0x33] sm:$0x1] %vm947, %v1326
  %v1329 = vld [vmem:[#allocation2 + $0x12] sm:$0x1]
  %1331 = vrot.lane.b32.xlu0 %v1329, 68
  %v1332 = vpop.permute.xlu0 %1331
  %1334 = vst.msk [vmem:[#allocation3 + $0x34] sm:$0x1] %vm1012, %v1332
  %v1335 = vld [vmem:[#allocation2 + $0x13] sm:$0x1]
  %1337 = vrot.lane.b32.xlu0 %v1335, 6
  %v1338 = vpop.permute.xlu0 %1337
  %1340 = vst.msk [vmem:[#allocation3 + $0x34] sm:$0x1] %vm1019, %v1338
  %v1341 = vld [vmem:[#allocation2 + $0x13] sm:$0x1]
  %1343 = vrot.lane.b32.xlu0 %v1341, 110
  %v1344 = vpop.permute.xlu0 %1343
  %1346 = vst.msk [vmem:[#allocation3 + $0x35] sm:$0x1] %vm947, %v1344
  %v1347 = vld [vmem:[#allocation2 + $0x13] sm:$0x1]
  %1349 = vrot.lane.b32.xlu0 %v1347, 86
  %v1350 = vpop.permute.xlu0 %1349
  %1352 = vst.msk [vmem:[#allocation3 + $0x36] sm:$0x1] %vm947, %v1350
  %v1353 = vld [vmem:[#allocation2 + $0x14] sm:$0x1]
  %1354 = vst.msk [vmem:[#allocation3 + $0x37] sm:$0x1] %vm947, %v1353
  %v1355 = vld [vmem:[#allocation2 + $0x14] sm:$0x1]
  %1357 = vrot.lane.b32.xlu0 %v1355, 104
  %v1358 = vpop.permute.xlu0 %1357
  %1360 = vst.msk [vmem:[#allocation3 + $0x38] sm:$0x1] %vm947, %v1358
  %v1361 = vld [vmem:[#allocation2 + $0x14] sm:$0x1]
  %1363 = vrot.lane.b32.xlu0 %v1361, 80
  %v1364 = vpop.permute.xlu0 %1363
  %1366 = vst.msk [vmem:[#allocation3 + $0x39] sm:$0x1] %vm960, %v1364
  %v1367 = vld [vmem:[#allocation2 + $0x15] sm:$0x1]
  %1369 = vrot.lane.b32.xlu0 %v1367, 18
  %v1370 = vpop.permute.xlu0 %1369
  %1372 = vst.msk [vmem:[#allocation3 + $0x39] sm:$0x1] %vm967, %v1370
  %v1373 = vld [vmem:[#allocation2 + $0x15] sm:$0x1]
  %1375 = vrot.lane.b32.xlu0 %v1373, 122
  %v1376 = vpop.permute.xlu0 %1375
  %1378 = vst.msk [vmem:[#allocation3 + $0x3a] sm:$0x1] %vm947, %v1376
  %v1379 = vld [vmem:[#allocation2 + $0x15] sm:$0x1]
  %1381 = vrot.lane.b32.xlu0 %v1379, 98
  %v1382 = vpop.permute.xlu0 %1381
  %1384 = vst.msk [vmem:[#allocation3 + $0x3b] sm:$0x1] %vm947, %v1382
  %v1385 = vld [vmem:[#allocation2 + $0x15] sm:$0x1]
  %1387 = vrot.lane.b32.xlu0 %v1385, 74
  %v1388 = vpop.permute.xlu0 %1387
  %1390 = vst.msk [vmem:[#allocation3 + $0x3c] sm:$0x1] %vm986, %v1388
  %v1391 = vld [vmem:[#allocation2 + $0x16] sm:$0x1]
  %1393 = vrot.lane.b32.xlu0 %v1391, 12
  %v1394 = vpop.permute.xlu0 %1393
  %1396 = vst.msk [vmem:[#allocation3 + $0x3c] sm:$0x1] %vm993, %v1394
  %v1397 = vld [vmem:[#allocation2 + $0x16] sm:$0x1]
  %1399 = vrot.lane.b32.xlu0 %v1397, 116
  %v1400 = vpop.permute.xlu0 %1399
  %1402 = vst.msk [vmem:[#allocation3 + $0x3d] sm:$0x1] %vm947, %v1400
  %v1403 = vld [vmem:[#allocation2 + $0x16] sm:$0x1]
  %1405 = vrot.lane.b32.xlu0 %v1403, 92
  %v1406 = vpop.permute.xlu0 %1405
  %1408 = vst.msk [vmem:[#allocation3 + $0x3e] sm:$0x1] %vm947, %v1406
  %v1409 = vld [vmem:[#allocation2 + $0x16] sm:$0x1]
  %1411 = vrot.lane.b32.xlu0 %v1409, 68
  %v1412 = vpop.permute.xlu0 %1411
  %1414 = vst.msk [vmem:[#allocation3 + $0x3f] sm:$0x1] %vm1012, %v1412
  %v1415 = vld [vmem:[#allocation2 + $0x17] sm:$0x1]
  %1417 = vrot.lane.b32.xlu0 %v1415, 6
  %v1418 = vpop.permute.xlu0 %1417
  %1420 = vst.msk [vmem:[#allocation3 + $0x3f] sm:$0x1] %vm1019, %v1418
  %v1421 = vld [vmem:[#allocation2 + $0x17] sm:$0x1]
  %1423 = vrot.lane.b32.xlu0 %v1421, 110
  %v1424 = vpop.permute.xlu0 %1423
  %1426 = vst.msk [vmem:[#allocation3 + $0x40] sm:$0x1] %vm947, %v1424
  %v1427 = vld [vmem:[#allocation2 + $0x17] sm:$0x1]
  %1429 = vrot.lane.b32.xlu0 %v1427, 86
  %v1430 = vpop.permute.xlu0 %1429
  %1432 = vst.msk [vmem:[#allocation3 + $0x41] sm:$0x1] %vm947, %v1430
  %v1433 = vld [vmem:[#allocation3] sm:$0xff]
  %v1434 = vld [vmem:[#allocation3 + $0x8] sm:$0xff]
  %v1435 = vld [vmem:[#allocation3 + $0x10] sm:$0xff]
  %v1436 = vld [vmem:[#allocation3 + $0x18] sm:$0xff]
  %v1437 = vld [vmem:[#allocation3 + $0x20] sm:$0xff]
  %v1438 = vld [vmem:[#allocation3 + $0x28] sm:$0xff]
  %v1439 = vld [vmem:[#allocation3 + $0x30] sm:$0xff]
  %v1440 = vld [vmem:[#allocation3 + $0x38] sm:$0xff]
  %v1441 = vld [vmem:[#allocation3 + $0x40] sm:$0x3]
  %v1442 = vld [vmem:[%s3] sm:$0xff]
  %v1443 = vld [vmem:[%s3 + $0x8] sm:$0xff]
  %v1444 = vld [vmem:[%s3 + $0x10] sm:$0xff]
  %v1445 = vld [vmem:[%s4] sm:$0x1]
  %v1446 = vlaneseq
  %v1447 = vshrl.u32 %v1446, 7
  %v1448 = vsub.s32 0, %v1447
  %v1449 = vrot.slane %v1445, %v1448
  %v1451 = vsel %vm29, %v1433, 0
  %v1454 = vsel %vm29, %v1434, 0
  %v1457 = vsel %vm29, %v1435, 0
  %v1460 = vsel %vm29, %v1436, 0
  %v1463 = vsel %vm29, %v1437, 0
  %v1466 = vsel %vm29, %v1438, 0
  %v1469 = vsel %vm29, %v1439, 0
  %v1472 = vsel %vm29, %v1440, 0
  %v1475 = vsel %vm29, %v1441, 0
  %1477 = vmatprep.subr.mxu0 0.0
  %1478 = vmatpush1.msra.mxu0 0.0
  %1479 = vmatprep.subr.mxu0 0.0
  %1480 = vmatpush1.msra.mxu0 0.0
  %1481 = vmatprep.subr.mxu0 0.0
  %1482 = vmatpush1.msra.mxu0 0.0
  %1483 = vmatprep.subr.mxu0 0.0
  %1484 = vmatpush1.msra.mxu0 0.0
  %1485 = vmatprep.subr.mxu0 0.0
  %1486 = vmatpush1.msra.mxu0 0.0
  %1487 = vmatprep.subr.mxu0 0.0
  %1488 = vmatpush1.msra.mxu0 0.0
  %1489 = vmatprep.subr.mxu0 0.0
  %1490 = vmatpush1.msra.mxu0 0.0
  %1491 = vmatprep.subr.mxu0 0.0
  %1492 = vmatpush1.msra.mxu0 0.0
  %1493 = vmatprep.subr.mxu0 0.0
  %1494 = vmatpush1.msra.mxu0 0.0
  %1495 = vmatprep.subr.mxu0 0.0
  %1496 = vmatpush1.msra.mxu0 0.0
  %1497 = vmatprep.subr.mxu0 0.0
  %1498 = vmatpush1.msra.mxu0 0.0
  %1499 = vmatprep.subr.mxu0 0.0
  %1500 = vmatpush1.msra.mxu0 0.0
  %1501 = vmatprep.subr.mxu0 0.0
  %1502 = vmatpush1.msra.mxu0 0.0
  %1503 = vmatprep.subr.mxu0 0.0
  %1504 = vmatpush1.msra.mxu0 %v1444
  %1505 = vmatprep.subr.mxu0 0.0
  %1506 = vmatpush1.msra.mxu0 %v1443
  %1507 = vmatprep.subr.mxu0 0.0
  %1508 = vmatpush1.msra.mxu0 %v1442
  %1509 = vmatprep.subr.mxu0 0.0
  %1510 = vmatpush2.msra.mxu0 0.0
  %1511 = vmatprep.subr.mxu0 0.0
  %1512 = vmatpush2.msra.mxu0 0.0
  %1513 = vmatprep.subr.mxu0 0.0
  %1514 = vmatpush2.msra.mxu0 0.0
  %1515 = vmatprep.subr.mxu0 0.0
  %1516 = vmatpush2.msra.mxu0 0.0
  %1517 = vmatprep.subr.mxu0 0.0
  %1518 = vmatpush2.msra.mxu0 0.0
  %1519 = vmatprep.subr.mxu0 0.0
  %1520 = vmatpush2.msra.mxu0 0.0
  %1521 = vmatprep.subr.mxu0 0.0
  %1522 = vmatpush2.msra.mxu0 0.0
  %1523 = vmatprep.subr.mxu0 0.0
  %1524 = vmatpush2.msra.mxu0 0.0
  %1525 = vmatprep.subr.mxu0 0.0
  %1526 = vmatpush2.msra.mxu0 0.0
  %1527 = vmatprep.subr.mxu0 0.0
  %1528 = vmatpush2.msra.mxu0 0.0
  %1529 = vmatprep.subr.mxu0 0.0
  %1530 = vmatpush2.msra.mxu0 0.0
  %1531 = vmatprep.subr.mxu0 0.0
  %1532 = vmatpush2.msra.mxu0 0.0
  %1533 = vmatprep.subr.mxu0 0.0
  %1534 = vmatpush2.msra.mxu0 0.0
  %1535 = vmatprep.subr.mxu0 0.0
  %1536 = vmatpush2.msra.mxu0 0.0
  %1537 = vmatprep.subr.mxu0 0.0
  %1538 = vmatpush2.msra.mxu0 0.0
  %1539 = vmatprep.subr.mxu0 0.0
  %1540 = vmatpush2.msra.mxu0 0.0
  %1541 = vmatprep.mubr.f32.mxu0 0.0
  %1542 = vmatmul.mubr.f32.gmra.mxu0 %v1451
  %v1543 = vpop.f32.mrf.mxu0
  %v1544 = vadd.f32 %v1449, %v1543
  %v1545 = vpop.f32.mrf.mxu0
  %1546 = vmatprep.mubr.f32.mxu0 0.0
  %1547 = vmatmul.mubr.f32.gmra.mxu0 %v1454
  %v1548 = vpop.f32.mrf.mxu0
  %v1549 = vadd.f32 %v1449, %v1548
  %v1550 = vpop.f32.mrf.mxu0
  %1551 = vmatprep.mubr.f32.mxu0 0.0
  %1552 = vmatmul.mubr.f32.gmra.mxu0 %v1457
  %v1553 = vpop.f32.mrf.mxu0
  %v1554 = vadd.f32 %v1449, %v1553
  %v1555 = vpop.f32.mrf.mxu0
  %1556 = vmatprep.mubr.f32.mxu0 0.0
  %1557 = vmatmul.mubr.f32.gmra.mxu0 %v1460
  %v1558 = vpop.f32.mrf.mxu0
  %v1559 = vadd.f32 %v1449, %v1558
  %v1560 = vpop.f32.mrf.mxu0
  %1561 = vmatprep.mubr.f32.mxu0 0.0
  %1562 = vmatmul.mubr.f32.gmra.mxu0 %v1463
  %v1563 = vpop.f32.mrf.mxu0
  %v1564 = vadd.f32 %v1449, %v1563
  %v1565 = vpop.f32.mrf.mxu0
  %1566 = vmatprep.mubr.f32.mxu0 0.0
  %1567 = vmatmul.mubr.f32.gmra.mxu0 %v1466
  %v1568 = vpop.f32.mrf.mxu0
  %v1569 = vadd.f32 %v1449, %v1568
  %v1570 = vpop.f32.mrf.mxu0
  %1571 = vmatprep.mubr.f32.mxu0 0.0
  %1572 = vmatmul.mubr.f32.gmra.mxu0 %v1469
  %v1573 = vpop.f32.mrf.mxu0
  %v1574 = vadd.f32 %v1449, %v1573
  %v1575 = vpop.f32.mrf.mxu0
  %1576 = vmatprep.mubr.f32.mxu0 0.0
  %1577 = vmatmul.mubr.f32.gmra.mxu0 %v1472
  %v1578 = vpop.f32.mrf.mxu0
  %v1579 = vadd.f32 %v1449, %v1578
  %v1580 = vpop.f32.mrf.mxu0
  %1581 = vmatprep.mubr.f32.mxu0 0.0
  %1582 = vmatmul.mubr.f32.gmra.mxu0 %v1475
  %v1583 = vpop.f32.mrf.mxu0
  %v1584 = vadd.f32 %v1449, %v1583
  %v1585 = vpop.f32.mrf.mxu0
  %1586 = vdwg.mxu0
  %v1587 = vtanh.pop %v1544
  %v1588 = vtanh.pop %v1549
  %v1589 = vtanh.pop %v1554
  %v1590 = vtanh.pop %v1559
  %v1591 = vtanh.pop %v1564
  %v1592 = vtanh.pop %v1569
  %v1593 = vtanh.pop %v1574
  %v1594 = vtanh.pop %v1579
  %v1595 = vtanh.pop %v1584
  %v1596 = vld [vmem:[%s3 + $0x18] sm:$0xff]
  %v1597 = vld [vmem:[%s3 + $0x20] sm:$0xff]
  %v1598 = vld [vmem:[%s3 + $0x28] sm:$0xff]
  %v1599 = vld [vmem:[%s4 + $0x1] sm:$0x1]
  %v1600 = vlaneseq
  %v1601 = vshrl.u32 %v1600, 7
  %v1602 = vsub.s32 0, %v1601
  %v1603 = vrot.slane %v1599, %v1602
  %v1605 = vsel %vm29, %v1587, 0
  %v1608 = vsel %vm29, %v1588, 0
  %v1611 = vsel %vm29, %v1589, 0
  %v1614 = vsel %vm29, %v1590, 0
  %v1617 = vsel %vm29, %v1591, 0
  %v1620 = vsel %vm29, %v1592, 0
  %v1623 = vsel %vm29, %v1593, 0
  %v1626 = vsel %vm29, %v1594, 0
  %v1629 = vsel %vm29, %v1595, 0
  %1631 = vmatprep.subr.mxu0 0.0
  %1632 = vmatpush1.msra.mxu0 0.0
  %1633 = vmatprep.subr.mxu0 0.0
  %1634 = vmatpush1.msra.mxu0 0.0
  %1635 = vmatprep.subr.mxu0 0.0
  %1636 = vmatpush1.msra.mxu0 0.0
  %1637 = vmatprep.subr.mxu0 0.0
  %1638 = vmatpush1.msra.mxu0 0.0
  %1639 = vmatprep.subr.mxu0 0.0
  %1640 = vmatpush1.msra.mxu0 0.0
  %1641 = vmatprep.subr.mxu0 0.0
  %1642 = vmatpush1.msra.mxu0 0.0
  %1643 = vmatprep.subr.mxu0 0.0
  %1644 = vmatpush1.msra.mxu0 0.0
  %1645 = vmatprep.subr.mxu0 0.0
  %1646 = vmatpush1.msra.mxu0 0.0
  %1647 = vmatprep.subr.mxu0 0.0
  %1648 = vmatpush1.msra.mxu0 0.0
  %1649 = vmatprep.subr.mxu0 0.0
  %1650 = vmatpush1.msra.mxu0 0.0
  %1651 = vmatprep.subr.mxu0 0.0
  %1652 = vmatpush1.msra.mxu0 0.0
  %1653 = vmatprep.subr.mxu0 0.0
  %1654 = vmatpush1.msra.mxu0 0.0
  %1655 = vmatprep.subr.mxu0 0.0
  %1656 = vmatpush1.msra.mxu0 0.0
  %1657 = vmatprep.subr.mxu0 0.0
  %1658 = vmatpush1.msra.mxu0 %v1598
  %1659 = vmatprep.subr.mxu0 0.0
  %1660 = vmatpush1.msra.mxu0 %v1597
  %1661 = vmatprep.subr.mxu0 0.0
  %1662 = vmatpush1.msra.mxu0 %v1596
  %1663 = vmatprep.subr.mxu0 0.0
  %1664 = vmatpush2.msra.mxu0 0.0
  %1665 = vmatprep.subr.mxu0 0.0
  %1666 = vmatpush2.msra.mxu0 0.0
  %1667 = vmatprep.subr.mxu0 0.0
  %1668 = vmatpush2.msra.mxu0 0.0
  %1669 = vmatprep.subr.mxu0 0.0
  %1670 = vmatpush2.msra.mxu0 0.0
  %1671 = vmatprep.subr.mxu0 0.0
  %1672 = vmatpush2.msra.mxu0 0.0
  %1673 = vmatprep.subr.mxu0 0.0
  %1674 = vmatpush2.msra.mxu0 0.0
  %1675 = vmatprep.subr.mxu0 0.0
  %1676 = vmatpush2.msra.mxu0 0.0
  %1677 = vmatprep.subr.mxu0 0.0
  %1678 = vmatpush2.msra.mxu0 0.0
  %1679 = vmatprep.subr.mxu0 0.0
  %1680 = vmatpush2.msra.mxu0 0.0
  %1681 = vmatprep.subr.mxu0 0.0
  %1682 = vmatpush2.msra.mxu0 0.0
  %1683 = vmatprep.subr.mxu0 0.0
  %1684 = vmatpush2.msra.mxu0 0.0
  %1685 = vmatprep.subr.mxu0 0.0
  %1686 = vmatpush2.msra.mxu0 0.0
  %1687 = vmatprep.subr.mxu0 0.0
  %1688 = vmatpush2.msra.mxu0 0.0
  %1689 = vmatprep.subr.mxu0 0.0
  %1690 = vmatpush2.msra.mxu0 0.0
  %1691 = vmatprep.subr.mxu0 0.0
  %1692 = vmatpush2.msra.mxu0 0.0
  %1693 = vmatprep.subr.mxu0 0.0
  %1694 = vmatpush2.msra.mxu0 0.0
  %1695 = vmatprep.mubr.f32.mxu0 0.0
  %1696 = vmatmul.mubr.f32.gmra.mxu0 %v1605
  %v1697 = vpop.f32.mrf.mxu0
  %v1698 = vadd.f32 %v1603, %v1697
  %v1699 = vpop.f32.mrf.mxu0
  %1700 = vmatprep.mubr.f32.mxu0 0.0
  %1701 = vmatmul.mubr.f32.gmra.mxu0 %v1608
  %v1702 = vpop.f32.mrf.mxu0
  %v1703 = vadd.f32 %v1603, %v1702
  %v1704 = vpop.f32.mrf.mxu0
  %1705 = vmatprep.mubr.f32.mxu0 0.0
  %1706 = vmatmul.mubr.f32.gmra.mxu0 %v1611
  %v1707 = vpop.f32.mrf.mxu0
  %v1708 = vadd.f32 %v1603, %v1707
  %v1709 = vpop.f32.mrf.mxu0
  %1710 = vmatprep.mubr.f32.mxu0 0.0
  %1711 = vmatmul.mubr.f32.gmra.mxu0 %v1614
  %v1712 = vpop.f32.mrf.mxu0
  %v1713 = vadd.f32 %v1603, %v1712
  %v1714 = vpop.f32.mrf.mxu0
  %1715 = vmatprep.mubr.f32.mxu0 0.0
  %1716 = vmatmul.mubr.f32.gmra.mxu0 %v1617
  %v1717 = vpop.f32.mrf.mxu0
  %v1718 = vadd.f32 %v1603, %v1717
  %v1719 = vpop.f32.mrf.mxu0
  %1720 = vmatprep.mubr.f32.mxu0 0.0
  %1721 = vmatmul.mubr.f32.gmra.mxu0 %v1620
  %v1722 = vpop.f32.mrf.mxu0
  %v1723 = vadd.f32 %v1603, %v1722
  %v1724 = vpop.f32.mrf.mxu0
  %1725 = vmatprep.mubr.f32.mxu0 0.0
  %1726 = vmatmul.mubr.f32.gmra.mxu0 %v1623
  %v1727 = vpop.f32.mrf.mxu0
  %v1728 = vadd.f32 %v1603, %v1727
  %v1729 = vpop.f32.mrf.mxu0
  %1730 = vmatprep.mubr.f32.mxu0 0.0
  %1731 = vmatmul.mubr.f32.gmra.mxu0 %v1626
  %v1732 = vpop.f32.mrf.mxu0
  %v1733 = vadd.f32 %v1603, %v1732
  %v1734 = vpop.f32.mrf.mxu0
  %1735 = vmatprep.mubr.f32.mxu0 0.0
  %1736 = vmatmul.mubr.f32.gmra.mxu0 %v1629
  %v1737 = vpop.f32.mrf.mxu0
  %v1738 = vadd.f32 %v1603, %v1737
  %v1739 = vpop.f32.mrf.mxu0
  %1740 = vdwg.mxu0
  %v1741 = vtanh.pop %v1698
  %v1742 = vtanh.pop %v1703
  %v1743 = vtanh.pop %v1708
  %v1744 = vtanh.pop %v1713
  %v1745 = vtanh.pop %v1718
  %v1746 = vtanh.pop %v1723
  %v1747 = vtanh.pop %v1728
  %v1748 = vtanh.pop %v1733
  %v1749 = vtanh.pop %v1738
  %1750 = vst.msk [vmem:[%s5] sm:$0xff] %vm29, %v1741
  %1751 = vst.msk [vmem:[%s5 + $0x8] sm:$0xff] %vm29, %v1742
  %1752 = vst.msk [vmem:[%s5 + $0x10] sm:$0xff] %vm29, %v1743
  %1753 = vst.msk [vmem:[%s5 + $0x18] sm:$0xff] %vm29, %v1744
  %1754 = vst.msk [vmem:[%s5 + $0x20] sm:$0xff] %vm29, %v1745
  %1755 = vst.msk [vmem:[%s5 + $0x28] sm:$0xff] %vm29, %v1746
  %1756 = vst.msk [vmem:[%s5 + $0x30] sm:$0xff] %vm29, %v1747
  %1757 = vst.msk [vmem:[%s5 + $0x38] sm:$0xff] %vm29, %v1748
  %vm1758 = vcmask 189440
  %1759 = vst.msk [vmem:[%s5 + $0x40] sm:$0x3] %vm1758, %v1749
  // Predicated region
  $region22: #{mod_forward.1} parent=0 // pred_check
    _
  $region23: #{mod_forward.1} parent=0 // pred_check_branch
    %1761 = sbr.rel (0) target = $region25
  $region24: #{mod_forward.1} parent=0 // pred_region
    _
  $region25: #{mod_forward.1} parent=0 // pred_fallthru
    _
  // Predicated region
  $region26: #{mod_forward.1} parent=0 // pred_check
    _
  $region27: #{mod_forward.1} parent=0 // pred_check_branch
    %1763 = sbr.rel (0) target = $region29
  $region28: #{mod_forward.1} parent=0 // pred_region
    _
  $region29: #{mod_forward.1} parent=0 // pred_fallthru
    _

</llo_original>
